<compile_context>
chip_gen: v6e
topology: v6e:2x2x1
jax: 0.10.0
libtpu: 0.0.40
codegen_flags: <defaults>
</compile_context>

<pallas_src>
import jax
import jax.numpy as jnp
from jax.experimental import pallas as pl
from jax.experimental.pallas import tpu as pltpu


def _cat_mm_kernel(x1_ref, x2_ref, x3f_ref, out_ref):
    # v1 = x1 @ x2   (MXU, f32 accumulate)
    v1 = jnp.dot(x1_ref[...], x2_ref[...], preferred_element_type=jnp.float32)

    # v3 = v2 @ x3 with v2 = [v1 v1 v1 v1]  ==  v1 @ (sum of x3's four N-row
    # blocks).  The fold is precomputed in the wrapper (x3f), so this matmul
    # is 4x smaller and the per-step body stays store+matmul only.
    v3 = jnp.dot(v1, x3f_ref[...], preferred_element_type=jnp.float32)

    v1o = v1.astype(out_ref.dtype)
    v3o = v3.astype(out_ref.dtype)

    # out = [ v2 | v3 | v1 | v2 | v3 ]  with v2 = 4 copies of v1.
    # Build the full row slab once -> one lane-dense store (instead of 11
    # misaligned masked stores).
    out_ref[...] = jnp.concatenate(
        [v1o] * 4 + [v3o] + [v1o] * 5 + [v3o], axis=1)


def cat_mm(x1, x2, x3, *, tm=None, vmem_budget_bytes=12 * 1024 * 1024):
    M, K = x1.shape
    K2, N = x2.shape
    assert K == K2
    R, P = x3.shape
    assert R == 4 * N, "x3 must have 4*N rows so that mm(v2, x3) is valid"

    out_dtype = jnp.result_type(x1.dtype, x2.dtype, x3.dtype)
    out_cols = 9 * N + 2 * P
    itemsize = jnp.dtype(out_dtype).itemsize
    # Sublane-packing alignment for the row tile: f32 -> 8, bf16 -> 16, i8 -> 32.
    row_mult = 8 * max(1, 4 // itemsize)

    def _round_up(v, m):
        return (v + m - 1) // m * m

    # Tile selection: large tiles for HBM-writeback roofline, padded tail.
    if tm is None:
        tm = min(M, 1024)
    tm = _round_up(max(int(tm), 1), row_mult)

    # Cap tm so depth-2 pipelined x1/out tiles fit a conservative VMEM budget
    # (stays within the default scoped-VMEM limit on v5e / v6e / v7x).
    def _tile_bytes(t):
        x1_b = t * K * jnp.dtype(x1.dtype).itemsize
        out_b = t * out_cols * itemsize
        return 2 * (x1_b + out_b)

    while tm > row_mult and _tile_bytes(tm) > vmem_budget_bytes:
        tm = _round_up(tm // 2, row_mult)

    grid = (pl.cdiv(M, tm),)

    # Hoisted fold of x3's four N-row blocks:
    #   v2 @ x3 == v1 @ (x3[0:N] + x3[N:2N] + x3[2N:3N] + x3[3N:4N])
    x3f = x3[0:N] + x3[N:2 * N] + x3[2 * N:3 * N] + x3[3 * N:4 * N]

    return pl.pallas_call(
        _cat_mm_kernel,
        out_shape=jax.ShapeDtypeStruct((M, out_cols), out_dtype),
        grid=grid,
        in_specs=[
            # x1 streamed row-tile by row-tile (auto double-buffered).
            pl.BlockSpec((tm, K), lambda i: (i, 0)),
            # x2 and the folded x3 are tiny and stay resident each step.
            pl.BlockSpec((K, N), lambda i: (0, 0)),
            pl.BlockSpec((N, P), lambda i: (0, 0)),
        ],
        out_specs=pl.BlockSpec((tm, out_cols), lambda i: (i, 0)),
        compiler_params=pltpu.CompilerParams(
            dimension_semantics=("parallel",),
        ),
    )(x1, x2, x3f)


def cat_mm_ref(x1, x2, x3):
    v1 = x1 @ x2
    v2 = jnp.concatenate([v1, v1, v1, v1], axis=1)
    v3 = v2 @ x3
    return jnp.concatenate([v2, v3, v1, v2, v3], axis=1)


if __name__ == "__main__":
    key = jax.random.PRNGKey(0)
    k1, k2, k3 = jax.random.split(key, 3)

    # Shapes consistent with the forward: x1:(M,K), x2:(K,N), x3:(4N,P)
    M, K, N, P = 1024, 16, 32, 8
    x1 = jax.random.normal(k1, (M, K), dtype=jnp.float32)
    x2 = jax.random.normal(k2, (K, N), dtype=jnp.float32)
    x3 = jax.random.normal(k3, (4 * N, P), dtype=jnp.float32)

    out = jax.block_until_ready(cat_mm(x1, x2, x3, tm=256))
    ref = cat_mm_ref(x1, x2, x3)
    assert out.shape == (M, 9 * N + 2 * P), out.shape
    # The x3 fold changes the accumulation order of the 4N contraction;
    # differences are at f32 rounding level.
    assert jnp.allclose(out, ref, atol=1e-4, rtol=1e-4), "mismatch vs reference"

    # Non-divisible M exercises the padded-tail path (grid = cdiv(M, tm)).
    M2 = 520
    x1b = jax.random.normal(k1, (M2, K), dtype=jnp.float32)
    out2 = jax.block_until_ready(cat_mm(x1b, x2, x3, tm=256))
    ref2 = cat_mm_ref(x1b, x2, x3)
    assert out2.shape == (M2, 9 * N + 2 * P), out2.shape
    assert jnp.allclose(out2, ref2, atol=1e-4, rtol=1e-4), "tail mismatch"

    print("KERNEL_OK")
</pallas_src>

<mosaic_0001>
module attributes {stable_mosaic.version = 11 : i64} {
  func.func @_cat_mm_kernel(%arg0: i32, %arg1: memref<256x16xf32, #tpu.memory_space<vmem>>, %arg2: memref<16x32xf32, #tpu.memory_space<vmem>>, %arg3: memref<32x8xf32, #tpu.memory_space<vmem>>, %arg4: memref<256x304xf32, #tpu.memory_space<vmem>>) attributes {dimension_semantics = [#tpu.dimension_semantics<parallel>], iteration_bounds = array<i64: 4>, scalar_prefetch = 0 : i64, scratch_operands = 0 : i64, tpu.core_type = #tpu.core_type<tc>, window_params = [{transform_indices = @transform_0, window_bounds = array<i64: 256, 16>}, {pipeline_mode = #tpu.pipeline_mode<synchronous>, transform_indices = @transform_1, window_bounds = array<i64: 16, 32>}, {pipeline_mode = #tpu.pipeline_mode<synchronous>, transform_indices = @transform_2, window_bounds = array<i64: 32, 8>}, {transform_indices = @transform_3, window_bounds = array<i64: 256, 304>}]} {
    %c0 = arith.constant 0 : index
    %c0_0 = arith.constant 0 : index
    %0 = vector.load %arg1[%c0, %c0_0] : memref<256x16xf32, #tpu.memory_space<vmem>>, vector<256x16xf32>
    %c0_1 = arith.constant 0 : index
    %c0_2 = arith.constant 0 : index
    %1 = vector.load %arg2[%c0_1, %c0_2] : memref<16x32xf32, #tpu.memory_space<vmem>>, vector<16x32xf32>
    %cst = arith.constant dense<0.000000e+00> : vector<256x32xf32>
    %2 = tpu.matmul %0, %1, %cst {dimension_numbers = #tpu.dot_dimension_numbers<[1], [0], [0], [1], [0, 0, 1, 1], [], []>} : vector<256x16xf32>, vector<16x32xf32>, vector<256x32xf32> -> vector<256x32xf32>
    %c0_3 = arith.constant 0 : index
    %c0_4 = arith.constant 0 : index
    %3 = vector.load %arg3[%c0_3, %c0_4] : memref<32x8xf32, #tpu.memory_space<vmem>>, vector<32x8xf32>
    %cst_5 = arith.constant dense<0.000000e+00> : vector<256x8xf32>
    %4 = tpu.matmul %2, %3, %cst_5 {dimension_numbers = #tpu.dot_dimension_numbers<[1], [0], [0], [1], [0, 0, 1, 1], [], []>} : vector<256x32xf32>, vector<32x8xf32>, vector<256x8xf32> -> vector<256x8xf32>
    %5 = tpu.concatenate %2, %2, %2, %2, %4, %2, %2, %2, %2, %2, %4 in 1 : vector<256x32xf32>, vector<256x32xf32>, vector<256x32xf32>, vector<256x32xf32>, vector<256x8xf32>, vector<256x32xf32>, vector<256x32xf32>, vector<256x32xf32>, vector<256x32xf32>, vector<256x32xf32>, vector<256x8xf32> -> vector<256x304xf32>
    %c0_6 = arith.constant 0 : index
    %c0_7 = arith.constant 0 : index
    %6 = vector.load %arg4[%c0_6, %c0_7] : memref<256x304xf32, #tpu.memory_space<vmem>>, vector<256x304xf32>
    tpu.vector_store %arg4[%c0_6, %c0_7], %5 {strides = array<i32>} : memref<256x304xf32, #tpu.memory_space<vmem>>, vector<256x304xf32>,
    return
  }
  func.func @transform_0(%arg0: i32) -> (i32, i32) {
    %c0_i32 = arith.constant 0 : i32
    %c0_i32_0 = arith.constant 0 : i32
    return %arg0, %c0_i32 : i32, i32
  }
  func.func @transform_1(%arg0: i32) -> (i32, i32) {
    %c0_i32 = arith.constant 0 : i32
    %c0_i32_0 = arith.constant 0 : i32
    %c0_i32_1 = arith.constant 0 : i32
    return %c0_i32, %c0_i32_0 : i32, i32
  }
  func.func @transform_2(%arg0: i32) -> (i32, i32) {
    %c0_i32 = arith.constant 0 : i32
    %c0_i32_0 = arith.constant 0 : i32
    %c0_i32_1 = arith.constant 0 : i32
    return %c0_i32, %c0_i32_0 : i32, i32
  }
  func.func @transform_3(%arg0: i32) -> (i32, i32) {
    %c0_i32 = arith.constant 0 : i32
    %c0_i32_0 = arith.constant 0 : i32
    return %arg0, %c0_i32 : i32, i32
  }
}

</mosaic_0001>

<llo_original>
// kernel: tpu_custom_call.1
$region0: #{tpu_custom_call.1}
  #allocation0 [shape = 'u32[]', space=smem, size = 0x4, offset = 0x4, fixed_abs, tag = 'smem constant byte address 0x4 - core index']
  #allocation1 [shape = 'u32[144,128]{1,0:T(1,128)}', space=vmem, size = 0x12000, scoped, tag = 'internal scratch']
  %s0 = inlined_call_operand.vmem [shape: f32[1024,16], index: 0, kind: input, shape index: {}]
  %s1 = inlined_call_operand.hbm [shape: f32[16,32], index: 1, kind: input, shape index: {}]
  %s2 = inlined_call_operand.vmem [shape: f32[32,8], index: 2, kind: input, shape index: {}]
  %s3 = inlined_call_operand.vmem [shape: f32[1024,304], index: 3, kind: output, shape index: {}]
  %s4 = sld [smem:[#allocation0]]
  $region49: #{tpu_custom_call.1} parent=0
    _
  %s6 = ssub.s32 1, %s4
  %s7 = scalar_select 0, %s6, %s4
  $region1: #{tpu_custom_call.1} parent=0
    #allocation2 [shape = 'u8[8192]{0}', space=vmem, size = 0x2000, scoped, tag = 'input window, operand 1, single buffered']
    #allocation3 [shape = 's32[2]{0}', space=sflag, size = 0x8, scoped, tag = 'scoped memory for tpu_custom_call.1']
    %8 = vsyncpa [#allocation3], 0
    loop: start=0, step=1, limit=6
    $region2: #{tpu_custom_call.1} parent=1 // loop_pre_header
      _
    $region3: #{tpu_custom_call.1} parent=1 // loop_header
      %s10 = sphi 0, %s14
      %p11 = scmp.ge.s32.totalorder %s10, 6
      %s20 = sphi 0, %s22
      %s23 = sphi 0, %s20
      %s24 = sphi 0, %s23
      %s40 = sphi 0, %s24
      %s44 = sphi 0, %s44
      %s46 = sphi 0, %s44
      %s47 = sphi 0, %s46
      %s61 = sphi 0, %s47
      %s65 = sphi 0, %s65
      %s67 = sphi 0, %s65
      %s68 = sphi 0, %s67
      %s82 = sphi 0, %s68
      %s88 = sphi 0, %s90
      %s91 = sphi 0, %s88
      %s92 = sphi 0, %s91
      %s108 = sphi 0, %s92
    $region4: #{tpu_custom_call.1} parent=1 // loop_header_branch
      %13 = sbr.rel (%p11) target = $region8
    $region5: #{tpu_custom_call.1} parent=1 // loop_body
      %s15 = ssub.s32 %s10, 1
      %s16 = ssub.s32 %s10, 2
      %s17 = sadd.s32 %s10, 1
      %s18 = ssub.s32 %s10, %s17
      %p19 = scmp.eq.s32.totalorder %s18, 0
      %s21 = sadd.s32 %s20, 1
      %s22 = scalar_select %p19, %s20, %s21
      %p25 = pneg %p19
      %p26 = scmp.eq.s32.totalorder %s10, 3
      %p27 = por %p25, %p26
      %p28 = scmp.ne.s32.totalorder %s20, %s23
      %p29 = scmp.eq.s32.totalorder %s10, 0
      %p30 = por %p28, %p29
      %p31 = scmp.ne.s32.totalorder %s20, %s23
      %p32 = scmp.eq.s32.totalorder %s15, 3
      %p33 = por %p31, %p32
      %p34 = scmp.ne.s32.totalorder %s23, %s24
      %p35 = scmp.eq.s32.totalorder %s15, 0
      %p36 = por %p34, %p35
      %p37 = scmp.ne.s32.totalorder %s23, %s24
      %p38 = scmp.eq.s32.totalorder %s16, 3
      %p39 = por %p37, %p38
      %p41 = scmp.ne.s32.totalorder %s24, %s40
      %p42 = scmp.eq.s32.totalorder %s16, 0
      %p43 = por %p41, %p42
      %s45 = sadd.s32 %s44, 1
      %p48 = scmp.eq.s32.totalorder %s10, 3
      %p49 = scmp.ne.s32.totalorder %s44, %s46
      %p50 = scmp.eq.s32.totalorder %s10, 0
      %p51 = por %p49, %p50
      %p52 = scmp.ne.s32.totalorder %s44, %s46
      %p53 = scmp.eq.s32.totalorder %s15, 3
      %p54 = por %p52, %p53
      %p55 = scmp.ne.s32.totalorder %s46, %s47
      %p56 = scmp.eq.s32.totalorder %s15, 0
      %p57 = por %p55, %p56
      %p58 = scmp.ne.s32.totalorder %s46, %s47
      %p59 = scmp.eq.s32.totalorder %s16, 3
      %p60 = por %p58, %p59
      %p62 = scmp.ne.s32.totalorder %s47, %s61
      %p63 = scmp.eq.s32.totalorder %s16, 0
      %p64 = por %p62, %p63
      %s66 = sadd.s32 %s65, 1
      %p69 = scmp.eq.s32.totalorder %s10, 3
      %p70 = scmp.ne.s32.totalorder %s65, %s67
      %p71 = scmp.eq.s32.totalorder %s10, 0
      %p72 = por %p70, %p71
      %p73 = scmp.ne.s32.totalorder %s65, %s67
      %p74 = scmp.eq.s32.totalorder %s15, 3
      %p75 = por %p73, %p74
      %p76 = scmp.ne.s32.totalorder %s67, %s68
      %p77 = scmp.eq.s32.totalorder %s15, 0
      %p78 = por %p76, %p77
      %p79 = scmp.ne.s32.totalorder %s67, %s68
      %p80 = scmp.eq.s32.totalorder %s16, 3
      %p81 = por %p79, %p80
      %p83 = scmp.ne.s32.totalorder %s68, %s82
      %p84 = scmp.eq.s32.totalorder %s16, 0
      %p85 = por %p83, %p84
      %s86 = ssub.s32 %s10, %s17
      %p87 = scmp.eq.s32.totalorder %s86, 0
      %s89 = sadd.s32 %s88, 1
      %s90 = scalar_select %p87, %s88, %s89
      %p93 = pneg %p87
      %p94 = scmp.eq.s32.totalorder %s10, 3
      %p95 = por %p93, %p94
      %p96 = scmp.ne.s32.totalorder %s88, %s91
      %p97 = scmp.eq.s32.totalorder %s10, 0
      %p98 = por %p96, %p97
      %p99 = scmp.ne.s32.totalorder %s88, %s91
      %p100 = scmp.eq.s32.totalorder %s15, 3
      %p101 = por %p99, %p100
      %p102 = scmp.ne.s32.totalorder %s91, %s92
      %p103 = scmp.eq.s32.totalorder %s15, 0
      %p104 = por %p102, %p103
      %p105 = scmp.ne.s32.totalorder %s91, %s92
      %p106 = scmp.eq.s32.totalorder %s16, 3
      %p107 = por %p105, %p106
      %p109 = scmp.ne.s32.totalorder %s92, %s108
      %p110 = scmp.eq.s32.totalorder %s16, 0
      %p111 = por %p109, %p110
      %p112 = scmp.le.s32.totalorder 1, %s10
      %p113 = scmp.lt.s32.totalorder %s10, 5
      %p114 = pnand %p112, %p113
      %p115 = pneg %p114
      // Predicated region
      $region9: #{tpu_custom_call.1} parent=5 // pred_check
        _
      $region10: #{tpu_custom_call.1} parent=5 // pred_check_branch
        %117 = sbr.rel (%p114) target = $region12
      $region11: #{tpu_custom_call.1} parent=5 // pred_region
        %s118 = ssub.s32 %s10, 1
        // Predicated region
        $region13: #{tpu_custom_call.1} parent=11 // pred_check
          %p119 = pneg %p57
        $region14: #{tpu_custom_call.1} parent=11 // pred_check_branch
          %121 = sbr.rel (%p119) target = $region16
        $region15: #{tpu_custom_call.1} parent=11 // pred_region
          %s123 = ssub.s32 256, 256
          %124 = vsyncadd [#allocation3], %s123
          %s125 = sshll.u32 [#allocation2], 4
          %s126 = int_to_ptr.vmem [resolvable:$true] %s125
          %131 = dma.hbm_to_vmem [thread:$0]  %s1, 256, %s126, [#allocation3], 128, 128, 8
        $region16: #{tpu_custom_call.1} parent=11 // pred_fallthru
          _
        // Predicated region
        $region17: #{tpu_custom_call.1} parent=11 // pred_check
          %p132 = pneg %p78
        $region18: #{tpu_custom_call.1} parent=11 // pred_check_branch
          %134 = sbr.rel (%p132) target = $region20
        $region19: #{tpu_custom_call.1} parent=11 // pred_region
          _
        $region20: #{tpu_custom_call.1} parent=11 // pred_fallthru
          _
      $region12: #{tpu_custom_call.1} parent=5 // pred_fallthru
        _
      %p135 = scmp.lt.s32.totalorder %s10, 4
      // Predicated region
      $region21: #{tpu_custom_call.1} parent=5 // pred_check
        %p136 = pneg %p135
      $region22: #{tpu_custom_call.1} parent=5 // pred_check_branch
        %138 = sbr.rel (%p136) target = $region24
      $region23: #{tpu_custom_call.1} parent=5 // pred_region
        // Predicated region
        $region25: #{tpu_custom_call.1} parent=23 // pred_check
          %p139 = pneg %p30
        $region26: #{tpu_custom_call.1} parent=23 // pred_check_branch
          %141 = sbr.rel (%p139) target = $region28
        $region27: #{tpu_custom_call.1} parent=23 // pred_region
          %s142 = smul.u32 32, %s10
          %p143 = scmp.lt.s32.totalorder %s142, 127
          %s144 = scalar_select %p143, %s142, 127
          %s145 = smul.addr %s144, 8
          %s146 = scalar_lea.vmem %s0, %s145
          %s147 = smul.u32 32, %s10
        $region28: #{tpu_custom_call.1} parent=23 // pred_fallthru
          _
      $region24: #{tpu_custom_call.1} parent=5 // pred_fallthru
        _
      %p148 = scmp.le.s32.totalorder 1, %s10
      %p149 = scmp.lt.s32.totalorder %s10, 5
      %p150 = pnand %p148, %p149
      %p151 = pneg %p150
      // Predicated region
      $region29: #{tpu_custom_call.1} parent=5 // pred_check
        _
      $region30: #{tpu_custom_call.1} parent=5 // pred_check_branch
        %153 = sbr.rel (%p150) target = $region32
      $region31: #{tpu_custom_call.1} parent=5 // pred_region
        %s154 = ssub.s32 %s10, 1
        // Predicated region
        $region33: #{tpu_custom_call.1} parent=31 // pred_check
          %p155 = pneg %p57
        $region34: #{tpu_custom_call.1} parent=31 // pred_check_branch
          %157 = sbr.rel (%p155) target = $region36
        $region35: #{tpu_custom_call.1} parent=31 // pred_region
          %158 = dma.done [#allocation3], 256
        $region36: #{tpu_custom_call.1} parent=31 // pred_fallthru
          _
        %s159 = smul.u32 32, %s15
        %p160 = scmp.lt.s32.totalorder %s159, 127
        %s161 = scalar_select %p160, %s159, 127
        %s162 = smul.addr %s161, 8
        %s163 = scalar_lea.vmem %s0, %s162
        %p164 = pneg %p36
        %p165 = pneg %p33
        %p166 = pneg %p57
        %p167 = pneg %p54
        %p168 = pneg %p78
        %p169 = pneg %p75
        %p170 = pneg %p104
        %p171 = pneg %p101
        %s172 = smul.u32 32, %s15
        %p173 = scmp.lt.s32.totalorder %s172, 127
        %s174 = scalar_select %p173, %s172, 127
        %s175 = smul.addr %s174, 3
        %s176 = smul.addr %s175, 8
        %s177 = scalar_lea.vmem %s3, %s176
        %s178 = smul.u32 32, %s15
        %p179 = scmp.lt.s32.totalorder %s178, 127
        %s180 = scalar_select %p179, %s178, 127
        %s181 = smul.addr %s180, 8
        %s182 = scalar_lea.vmem %s0, %s181
        %s183 = smul.u32 32, %s15
        %s184 = smul.u32 32, %s15
        %p185 = scmp.lt.s32.totalorder %s184, 127
        %s186 = scalar_select %p185, %s184, 127
        %s187 = smul.addr %s186, 3
        %s188 = smul.addr %s187, 8
        %s189 = scalar_lea.vmem %s3, %s188
        %s190 = smul.u32 32, %s15
        %v191 = vld [vmem:[%s182] sm:$0xff]
        %v192 = vld [vmem:[%s182 + $0x8] sm:$0xff]
        %v193 = vld [vmem:[%s182 + $0x10] sm:$0xff]
        %v194 = vld [vmem:[%s182 + $0x18] sm:$0xff]
        %v195 = vld [vmem:[%s182 + $0x20] sm:$0xff]
        %v196 = vld [vmem:[%s182 + $0x28] sm:$0xff]
        %v197 = vld [vmem:[%s182 + $0x30] sm:$0xff]
        %v198 = vld [vmem:[%s182 + $0x38] sm:$0xff]
        %v199 = vld [vmem:[%s182 + $0x40] sm:$0xff]
        %v200 = vld [vmem:[%s182 + $0x48] sm:$0xff]
        %v201 = vld [vmem:[%s182 + $0x50] sm:$0xff]
        %v202 = vld [vmem:[%s182 + $0x58] sm:$0xff]
        %v203 = vld [vmem:[%s182 + $0x60] sm:$0xff]
        %v204 = vld [vmem:[%s182 + $0x68] sm:$0xff]
        %v205 = vld [vmem:[%s182 + $0x70] sm:$0xff]
        %v206 = vld [vmem:[%s182 + $0x78] sm:$0xff]
        %v207 = vld [vmem:[%s182 + $0x80] sm:$0xff]
        %v208 = vld [vmem:[%s182 + $0x88] sm:$0xff]
        %v209 = vld [vmem:[%s182 + $0x90] sm:$0xff]
        %v210 = vld [vmem:[%s182 + $0x98] sm:$0xff]
        %v211 = vld [vmem:[%s182 + $0xa0] sm:$0xff]
        %v212 = vld [vmem:[%s182 + $0xa8] sm:$0xff]
        %v213 = vld [vmem:[%s182 + $0xb0] sm:$0xff]
        %v214 = vld [vmem:[%s182 + $0xb8] sm:$0xff]
        %v215 = vld [vmem:[%s182 + $0xc0] sm:$0xff]
        %v216 = vld [vmem:[%s182 + $0xc8] sm:$0xff]
        %v217 = vld [vmem:[%s182 + $0xd0] sm:$0xff]
        %v218 = vld [vmem:[%s182 + $0xd8] sm:$0xff]
        %v219 = vld [vmem:[%s182 + $0xe0] sm:$0xff]
        %v220 = vld [vmem:[%s182 + $0xe8] sm:$0xff]
        %v221 = vld [vmem:[%s182 + $0xf0] sm:$0xff]
        %v222 = vld [vmem:[%s182 + $0xf8] sm:$0xff]
        %v223 = vld [vmem:[#allocation2] sm:$0xff]
        %v224 = vld [vmem:[#allocation2 + $0x8] sm:$0xff]
        %vm225 = vcmask 130048
        %v227 = vsel %vm225, %v191, 0
        %v230 = vsel %vm225, %v192, 0
        %v233 = vsel %vm225, %v193, 0
        %v236 = vsel %vm225, %v194, 0
        %v239 = vsel %vm225, %v195, 0
        %v242 = vsel %vm225, %v196, 0
        %v245 = vsel %vm225, %v197, 0
        %v248 = vsel %vm225, %v198, 0
        %v251 = vsel %vm225, %v199, 0
        %v254 = vsel %vm225, %v200, 0
        %v257 = vsel %vm225, %v201, 0
        %v260 = vsel %vm225, %v202, 0
        %v263 = vsel %vm225, %v203, 0
        %v266 = vsel %vm225, %v204, 0
        %v269 = vsel %vm225, %v205, 0
        %v272 = vsel %vm225, %v206, 0
        %v275 = vsel %vm225, %v207, 0
        %v278 = vsel %vm225, %v208, 0
        %v281 = vsel %vm225, %v209, 0
        %v284 = vsel %vm225, %v210, 0
        %v287 = vsel %vm225, %v211, 0
        %v290 = vsel %vm225, %v212, 0
        %v293 = vsel %vm225, %v213, 0
        %v296 = vsel %vm225, %v214, 0
        %v299 = vsel %vm225, %v215, 0
        %v302 = vsel %vm225, %v216, 0
        %v305 = vsel %vm225, %v217, 0
        %v308 = vsel %vm225, %v218, 0
        %v311 = vsel %vm225, %v219, 0
        %v314 = vsel %vm225, %v220, 0
        %v317 = vsel %vm225, %v221, 0
        %v320 = vsel %vm225, %v222, 0
        %322 = vmatprep.subr.mxu0 0.0
        %323 = vmatpush1.msra.mxu0 0.0
        %324 = vmatprep.subr.mxu0 0.0
        %325 = vmatpush1.msra.mxu0 0.0
        %326 = vmatprep.subr.mxu0 0.0
        %327 = vmatpush1.msra.mxu0 0.0
        %328 = vmatprep.subr.mxu0 0.0
        %329 = vmatpush1.msra.mxu0 0.0
        %330 = vmatprep.subr.mxu0 0.0
        %331 = vmatpush1.msra.mxu0 0.0
        %332 = vmatprep.subr.mxu0 0.0
        %333 = vmatpush1.msra.mxu0 0.0
        %334 = vmatprep.subr.mxu0 0.0
        %335 = vmatpush1.msra.mxu0 0.0
        %336 = vmatprep.subr.mxu0 0.0
        %337 = vmatpush1.msra.mxu0 0.0
        %338 = vmatprep.subr.mxu0 0.0
        %339 = vmatpush1.msra.mxu0 0.0
        %340 = vmatprep.subr.mxu0 0.0
        %341 = vmatpush1.msra.mxu0 0.0
        %342 = vmatprep.subr.mxu0 0.0
        %343 = vmatpush1.msra.mxu0 0.0
        %344 = vmatprep.subr.mxu0 0.0
        %345 = vmatpush1.msra.mxu0 0.0
        %346 = vmatprep.subr.mxu0 0.0
        %347 = vmatpush1.msra.mxu0 0.0
        %348 = vmatprep.subr.mxu0 0.0
        %349 = vmatpush1.msra.mxu0 0.0
        %350 = vmatprep.subr.mxu0 0.0
        %351 = vmatpush1.msra.mxu0 %v224
        %352 = vmatprep.subr.mxu0 0.0
        %353 = vmatpush1.msra.mxu0 %v223
        %354 = vmatprep.subr.mxu0 0.0
        %355 = vmatpush2.msra.mxu0 0.0
        %356 = vmatprep.subr.mxu0 0.0
        %357 = vmatpush2.msra.mxu0 0.0
        %358 = vmatprep.subr.mxu0 0.0
        %359 = vmatpush2.msra.mxu0 0.0
        %360 = vmatprep.subr.mxu0 0.0
        %361 = vmatpush2.msra.mxu0 0.0
        %362 = vmatprep.subr.mxu0 0.0
        %363 = vmatpush2.msra.mxu0 0.0
        %364 = vmatprep.subr.mxu0 0.0
        %365 = vmatpush2.msra.mxu0 0.0
        %366 = vmatprep.subr.mxu0 0.0
        %367 = vmatpush2.msra.mxu0 0.0
        %368 = vmatprep.subr.mxu0 0.0
        %369 = vmatpush2.msra.mxu0 0.0
        %370 = vmatprep.subr.mxu0 0.0
        %371 = vmatpush2.msra.mxu0 0.0
        %372 = vmatprep.subr.mxu0 0.0
        %373 = vmatpush2.msra.mxu0 0.0
        %374 = vmatprep.subr.mxu0 0.0
        %375 = vmatpush2.msra.mxu0 0.0
        %376 = vmatprep.subr.mxu0 0.0
        %377 = vmatpush2.msra.mxu0 0.0
        %378 = vmatprep.subr.mxu0 0.0
        %379 = vmatpush2.msra.mxu0 0.0
        %380 = vmatprep.subr.mxu0 0.0
        %381 = vmatpush2.msra.mxu0 0.0
        %382 = vmatprep.subr.mxu0 0.0
        %383 = vmatpush2.msra.mxu0 0.0
        %384 = vmatprep.subr.mxu0 0.0
        %385 = vmatpush2.msra.mxu0 0.0
        %386 = vmatprep.mubr.f32.mxu0 0.0
        %387 = vmatmul.mubr.f32.gmra.mxu0 %v227
        %v388 = vpop.f32.mrf.mxu0
        %v389 = vadd.f32 0.0, %v388
        %v390 = vpop.f32.mrf.mxu0
        %391 = vmatprep.mubr.f32.mxu0 0.0
        %392 = vmatmul.mubr.f32.gmra.mxu0 %v230
        %v393 = vpop.f32.mrf.mxu0
        %v394 = vadd.f32 0.0, %v393
        %v395 = vpop.f32.mrf.mxu0
        %396 = vmatprep.mubr.f32.mxu0 0.0
        %397 = vmatmul.mubr.f32.gmra.mxu0 %v233
        %v398 = vpop.f32.mrf.mxu0
        %v399 = vadd.f32 0.0, %v398
        %v400 = vpop.f32.mrf.mxu0
        %401 = vmatprep.mubr.f32.mxu0 0.0
        %402 = vmatmul.mubr.f32.gmra.mxu0 %v236
        %v403 = vpop.f32.mrf.mxu0
        %v404 = vadd.f32 0.0, %v403
        %v405 = vpop.f32.mrf.mxu0
        %406 = vmatprep.mubr.f32.mxu0 0.0
        %407 = vmatmul.mubr.f32.gmra.mxu0 %v239
        %v408 = vpop.f32.mrf.mxu0
        %v409 = vadd.f32 0.0, %v408
        %v410 = vpop.f32.mrf.mxu0
        %411 = vmatprep.mubr.f32.mxu0 0.0
        %412 = vmatmul.mubr.f32.gmra.mxu0 %v242
        %v413 = vpop.f32.mrf.mxu0
        %v414 = vadd.f32 0.0, %v413
        %v415 = vpop.f32.mrf.mxu0
        %416 = vmatprep.mubr.f32.mxu0 0.0
        %417 = vmatmul.mubr.f32.gmra.mxu0 %v245
        %v418 = vpop.f32.mrf.mxu0
        %v419 = vadd.f32 0.0, %v418
        %v420 = vpop.f32.mrf.mxu0
        %421 = vmatprep.mubr.f32.mxu0 0.0
        %422 = vmatmul.mubr.f32.gmra.mxu0 %v248
        %v423 = vpop.f32.mrf.mxu0
        %v424 = vadd.f32 0.0, %v423
        %v425 = vpop.f32.mrf.mxu0
        %426 = vmatprep.mubr.f32.mxu0 0.0
        %427 = vmatmul.mubr.f32.gmra.mxu0 %v251
        %v428 = vpop.f32.mrf.mxu0
        %v429 = vadd.f32 0.0, %v428
        %v430 = vpop.f32.mrf.mxu0
        %431 = vmatprep.mubr.f32.mxu0 0.0
        %432 = vmatmul.mubr.f32.gmra.mxu0 %v254
        %v433 = vpop.f32.mrf.mxu0
        %v434 = vadd.f32 0.0, %v433
        %v435 = vpop.f32.mrf.mxu0
        %436 = vmatprep.mubr.f32.mxu0 0.0
        %437 = vmatmul.mubr.f32.gmra.mxu0 %v257
        %v438 = vpop.f32.mrf.mxu0
        %v439 = vadd.f32 0.0, %v438
        %v440 = vpop.f32.mrf.mxu0
        %441 = vmatprep.mubr.f32.mxu0 0.0
        %442 = vmatmul.mubr.f32.gmra.mxu0 %v260
        %v443 = vpop.f32.mrf.mxu0
        %v444 = vadd.f32 0.0, %v443
        %v445 = vpop.f32.mrf.mxu0
        %446 = vmatprep.mubr.f32.mxu0 0.0
        %447 = vmatmul.mubr.f32.gmra.mxu0 %v263
        %v448 = vpop.f32.mrf.mxu0
        %v449 = vadd.f32 0.0, %v448
        %v450 = vpop.f32.mrf.mxu0
        %451 = vmatprep.mubr.f32.mxu0 0.0
        %452 = vmatmul.mubr.f32.gmra.mxu0 %v266
        %v453 = vpop.f32.mrf.mxu0
        %v454 = vadd.f32 0.0, %v453
        %v455 = vpop.f32.mrf.mxu0
        %456 = vmatprep.mubr.f32.mxu0 0.0
        %457 = vmatmul.mubr.f32.gmra.mxu0 %v269
        %v458 = vpop.f32.mrf.mxu0
        %v459 = vadd.f32 0.0, %v458
        %v460 = vpop.f32.mrf.mxu0
        %461 = vmatprep.mubr.f32.mxu0 0.0
        %462 = vmatmul.mubr.f32.gmra.mxu0 %v272
        %v463 = vpop.f32.mrf.mxu0
        %v464 = vadd.f32 0.0, %v463
        %v465 = vpop.f32.mrf.mxu0
        %466 = vmatprep.mubr.f32.mxu0 0.0
        %467 = vmatmul.mubr.f32.gmra.mxu0 %v275
        %v468 = vpop.f32.mrf.mxu0
        %v469 = vadd.f32 0.0, %v468
        %v470 = vpop.f32.mrf.mxu0
        %471 = vmatprep.mubr.f32.mxu0 0.0
        %472 = vmatmul.mubr.f32.gmra.mxu0 %v278
        %v473 = vpop.f32.mrf.mxu0
        %v474 = vadd.f32 0.0, %v473
        %v475 = vpop.f32.mrf.mxu0
        %476 = vmatprep.mubr.f32.mxu0 0.0
        %477 = vmatmul.mubr.f32.gmra.mxu0 %v281
        %v478 = vpop.f32.mrf.mxu0
        %v479 = vadd.f32 0.0, %v478
        %v480 = vpop.f32.mrf.mxu0
        %481 = vmatprep.mubr.f32.mxu0 0.0
        %482 = vmatmul.mubr.f32.gmra.mxu0 %v284
        %v483 = vpop.f32.mrf.mxu0
        %v484 = vadd.f32 0.0, %v483
        %v485 = vpop.f32.mrf.mxu0
        %486 = vmatprep.mubr.f32.mxu0 0.0
        %487 = vmatmul.mubr.f32.gmra.mxu0 %v287
        %v488 = vpop.f32.mrf.mxu0
        %v489 = vadd.f32 0.0, %v488
        %v490 = vpop.f32.mrf.mxu0
        %491 = vmatprep.mubr.f32.mxu0 0.0
        %492 = vmatmul.mubr.f32.gmra.mxu0 %v290
        %v493 = vpop.f32.mrf.mxu0
        %v494 = vadd.f32 0.0, %v493
        %v495 = vpop.f32.mrf.mxu0
        %496 = vmatprep.mubr.f32.mxu0 0.0
        %497 = vmatmul.mubr.f32.gmra.mxu0 %v293
        %v498 = vpop.f32.mrf.mxu0
        %v499 = vadd.f32 0.0, %v498
        %v500 = vpop.f32.mrf.mxu0
        %501 = vmatprep.mubr.f32.mxu0 0.0
        %502 = vmatmul.mubr.f32.gmra.mxu0 %v296
        %v503 = vpop.f32.mrf.mxu0
        %v504 = vadd.f32 0.0, %v503
        %v505 = vpop.f32.mrf.mxu0
        %506 = vmatprep.mubr.f32.mxu0 0.0
        %507 = vmatmul.mubr.f32.gmra.mxu0 %v299
        %v508 = vpop.f32.mrf.mxu0
        %v509 = vadd.f32 0.0, %v508
        %v510 = vpop.f32.mrf.mxu0
        %511 = vmatprep.mubr.f32.mxu0 0.0
        %512 = vmatmul.mubr.f32.gmra.mxu0 %v302
        %v513 = vpop.f32.mrf.mxu0
        %v514 = vadd.f32 0.0, %v513
        %v515 = vpop.f32.mrf.mxu0
        %516 = vmatprep.mubr.f32.mxu0 0.0
        %517 = vmatmul.mubr.f32.gmra.mxu0 %v305
        %v518 = vpop.f32.mrf.mxu0
        %v519 = vadd.f32 0.0, %v518
        %v520 = vpop.f32.mrf.mxu0
        %521 = vmatprep.mubr.f32.mxu0 0.0
        %522 = vmatmul.mubr.f32.gmra.mxu0 %v308
        %v523 = vpop.f32.mrf.mxu0
        %v524 = vadd.f32 0.0, %v523
        %v525 = vpop.f32.mrf.mxu0
        %526 = vmatprep.mubr.f32.mxu0 0.0
        %527 = vmatmul.mubr.f32.gmra.mxu0 %v311
        %v528 = vpop.f32.mrf.mxu0
        %v529 = vadd.f32 0.0, %v528
        %v530 = vpop.f32.mrf.mxu0
        %531 = vmatprep.mubr.f32.mxu0 0.0
        %532 = vmatmul.mubr.f32.gmra.mxu0 %v314
        %v533 = vpop.f32.mrf.mxu0
        %v534 = vadd.f32 0.0, %v533
        %v535 = vpop.f32.mrf.mxu0
        %536 = vmatprep.mubr.f32.mxu0 0.0
        %537 = vmatmul.mubr.f32.gmra.mxu0 %v317
        %v538 = vpop.f32.mrf.mxu0
        %v539 = vadd.f32 0.0, %v538
        %v540 = vpop.f32.mrf.mxu0
        %541 = vmatprep.mubr.f32.mxu0 0.0
        %542 = vmatmul.mubr.f32.gmra.mxu0 %v320
        %v543 = vpop.f32.mrf.mxu0
        %v544 = vadd.f32 0.0, %v543
        %v545 = vpop.f32.mrf.mxu0
        %546 = vdwg.mxu0
        %v547 = vld [vmem:[%s2] sm:$0xff]
        %v548 = vld [vmem:[%s2 + $0x8] sm:$0xff]
        %v549 = vld [vmem:[%s2 + $0x10] sm:$0xff]
        %v550 = vld [vmem:[%s2 + $0x18] sm:$0xff]
        %vm551 = vcmask 261120
        %v553 = vsel %vm551, %v389, 0
        %v556 = vsel %vm551, %v394, 0
        %v559 = vsel %vm551, %v399, 0
        %v562 = vsel %vm551, %v404, 0
        %v565 = vsel %vm551, %v409, 0
        %v568 = vsel %vm551, %v414, 0
        %v571 = vsel %vm551, %v419, 0
        %v574 = vsel %vm551, %v424, 0
        %v577 = vsel %vm551, %v429, 0
        %v580 = vsel %vm551, %v434, 0
        %v583 = vsel %vm551, %v439, 0
        %v586 = vsel %vm551, %v444, 0
        %v589 = vsel %vm551, %v449, 0
        %v592 = vsel %vm551, %v454, 0
        %v595 = vsel %vm551, %v459, 0
        %v598 = vsel %vm551, %v464, 0
        %v601 = vsel %vm551, %v469, 0
        %v604 = vsel %vm551, %v474, 0
        %v607 = vsel %vm551, %v479, 0
        %v610 = vsel %vm551, %v484, 0
        %v613 = vsel %vm551, %v489, 0
        %v616 = vsel %vm551, %v494, 0
        %v619 = vsel %vm551, %v499, 0
        %v622 = vsel %vm551, %v504, 0
        %v625 = vsel %vm551, %v509, 0
        %v628 = vsel %vm551, %v514, 0
        %v631 = vsel %vm551, %v519, 0
        %v634 = vsel %vm551, %v524, 0
        %v637 = vsel %vm551, %v529, 0
        %v640 = vsel %vm551, %v534, 0
        %v643 = vsel %vm551, %v539, 0
        %v646 = vsel %vm551, %v544, 0
        %648 = vmatprep.subr.mxu0 0.0
        %649 = vmatpush1.msra.mxu0 0.0
        %650 = vmatprep.subr.mxu0 0.0
        %651 = vmatpush1.msra.mxu0 0.0
        %652 = vmatprep.subr.mxu0 0.0
        %653 = vmatpush1.msra.mxu0 0.0
        %654 = vmatprep.subr.mxu0 0.0
        %655 = vmatpush1.msra.mxu0 0.0
        %656 = vmatprep.subr.mxu0 0.0
        %657 = vmatpush1.msra.mxu0 0.0
        %658 = vmatprep.subr.mxu0 0.0
        %659 = vmatpush1.msra.mxu0 0.0
        %660 = vmatprep.subr.mxu0 0.0
        %661 = vmatpush1.msra.mxu0 0.0
        %662 = vmatprep.subr.mxu0 0.0
        %663 = vmatpush1.msra.mxu0 0.0
        %664 = vmatprep.subr.mxu0 0.0
        %665 = vmatpush1.msra.mxu0 0.0
        %666 = vmatprep.subr.mxu0 0.0
        %667 = vmatpush1.msra.mxu0 0.0
        %668 = vmatprep.subr.mxu0 0.0
        %669 = vmatpush1.msra.mxu0 0.0
        %670 = vmatprep.subr.mxu0 0.0
        %671 = vmatpush1.msra.mxu0 0.0
        %672 = vmatprep.subr.mxu0 0.0
        %673 = vmatpush1.msra.mxu0 %v550
        %674 = vmatprep.subr.mxu0 0.0
        %675 = vmatpush1.msra.mxu0 %v549
        %676 = vmatprep.subr.mxu0 0.0
        %677 = vmatpush1.msra.mxu0 %v548
        %678 = vmatprep.subr.mxu0 0.0
        %679 = vmatpush1.msra.mxu0 %v547
        %680 = vmatprep.subr.mxu0 0.0
        %681 = vmatpush2.msra.mxu0 0.0
        %682 = vmatprep.subr.mxu0 0.0
        %683 = vmatpush2.msra.mxu0 0.0
        %684 = vmatprep.subr.mxu0 0.0
        %685 = vmatpush2.msra.mxu0 0.0
        %686 = vmatprep.subr.mxu0 0.0
        %687 = vmatpush2.msra.mxu0 0.0
        %688 = vmatprep.subr.mxu0 0.0
        %689 = vmatpush2.msra.mxu0 0.0
        %690 = vmatprep.subr.mxu0 0.0
        %691 = vmatpush2.msra.mxu0 0.0
        %692 = vmatprep.subr.mxu0 0.0
        %693 = vmatpush2.msra.mxu0 0.0
        %694 = vmatprep.subr.mxu0 0.0
        %695 = vmatpush2.msra.mxu0 0.0
        %696 = vmatprep.subr.mxu0 0.0
        %697 = vmatpush2.msra.mxu0 0.0
        %698 = vmatprep.subr.mxu0 0.0
        %699 = vmatpush2.msra.mxu0 0.0
        %700 = vmatprep.subr.mxu0 0.0
        %701 = vmatpush2.msra.mxu0 0.0
        %702 = vmatprep.subr.mxu0 0.0
        %703 = vmatpush2.msra.mxu0 0.0
        %704 = vmatprep.subr.mxu0 0.0
        %705 = vmatpush2.msra.mxu0 0.0
        %706 = vmatprep.subr.mxu0 0.0
        %707 = vmatpush2.msra.mxu0 0.0
        %708 = vmatprep.subr.mxu0 0.0
        %709 = vmatpush2.msra.mxu0 0.0
        %710 = vmatprep.subr.mxu0 0.0
        %711 = vmatpush2.msra.mxu0 0.0
        %712 = vmatprep.mubr.f32.mxu0 0.0
        %713 = vmatmul.mubr.f32.gmra.mxu0 %v553
        %v714 = vpop.f32.mrf.mxu0
        %v715 = vadd.f32 0.0, %v714
        %v716 = vpop.f32.mrf.mxu0
        %717 = vmatprep.mubr.f32.mxu0 0.0
        %718 = vmatmul.mubr.f32.gmra.mxu0 %v556
        %v719 = vpop.f32.mrf.mxu0
        %v720 = vadd.f32 0.0, %v719
        %v721 = vpop.f32.mrf.mxu0
        %722 = vmatprep.mubr.f32.mxu0 0.0
        %723 = vmatmul.mubr.f32.gmra.mxu0 %v559
        %v724 = vpop.f32.mrf.mxu0
        %v725 = vadd.f32 0.0, %v724
        %v726 = vpop.f32.mrf.mxu0
        %727 = vmatprep.mubr.f32.mxu0 0.0
        %728 = vmatmul.mubr.f32.gmra.mxu0 %v562
        %v729 = vpop.f32.mrf.mxu0
        %v730 = vadd.f32 0.0, %v729
        %v731 = vpop.f32.mrf.mxu0
        %732 = vmatprep.mubr.f32.mxu0 0.0
        %733 = vmatmul.mubr.f32.gmra.mxu0 %v565
        %v734 = vpop.f32.mrf.mxu0
        %v735 = vadd.f32 0.0, %v734
        %v736 = vpop.f32.mrf.mxu0
        %737 = vmatprep.mubr.f32.mxu0 0.0
        %738 = vmatmul.mubr.f32.gmra.mxu0 %v568
        %v739 = vpop.f32.mrf.mxu0
        %v740 = vadd.f32 0.0, %v739
        %v741 = vpop.f32.mrf.mxu0
        %742 = vmatprep.mubr.f32.mxu0 0.0
        %743 = vmatmul.mubr.f32.gmra.mxu0 %v571
        %v744 = vpop.f32.mrf.mxu0
        %v745 = vadd.f32 0.0, %v744
        %v746 = vpop.f32.mrf.mxu0
        %747 = vmatprep.mubr.f32.mxu0 0.0
        %748 = vmatmul.mubr.f32.gmra.mxu0 %v574
        %v749 = vpop.f32.mrf.mxu0
        %v750 = vadd.f32 0.0, %v749
        %v751 = vpop.f32.mrf.mxu0
        %752 = vmatprep.mubr.f32.mxu0 0.0
        %753 = vmatmul.mubr.f32.gmra.mxu0 %v577
        %v754 = vpop.f32.mrf.mxu0
        %v755 = vadd.f32 0.0, %v754
        %v756 = vpop.f32.mrf.mxu0
        %757 = vmatprep.mubr.f32.mxu0 0.0
        %758 = vmatmul.mubr.f32.gmra.mxu0 %v580
        %v759 = vpop.f32.mrf.mxu0
        %v760 = vadd.f32 0.0, %v759
        %v761 = vpop.f32.mrf.mxu0
        %762 = vmatprep.mubr.f32.mxu0 0.0
        %763 = vmatmul.mubr.f32.gmra.mxu0 %v583
        %v764 = vpop.f32.mrf.mxu0
        %v765 = vadd.f32 0.0, %v764
        %v766 = vpop.f32.mrf.mxu0
        %767 = vmatprep.mubr.f32.mxu0 0.0
        %768 = vmatmul.mubr.f32.gmra.mxu0 %v586
        %v769 = vpop.f32.mrf.mxu0
        %v770 = vadd.f32 0.0, %v769
        %v771 = vpop.f32.mrf.mxu0
        %772 = vmatprep.mubr.f32.mxu0 0.0
        %773 = vmatmul.mubr.f32.gmra.mxu0 %v589
        %v774 = vpop.f32.mrf.mxu0
        %v775 = vadd.f32 0.0, %v774
        %v776 = vpop.f32.mrf.mxu0
        %777 = vmatprep.mubr.f32.mxu0 0.0
        %778 = vmatmul.mubr.f32.gmra.mxu0 %v592
        %v779 = vpop.f32.mrf.mxu0
        %v780 = vadd.f32 0.0, %v779
        %v781 = vpop.f32.mrf.mxu0
        %782 = vmatprep.mubr.f32.mxu0 0.0
        %783 = vmatmul.mubr.f32.gmra.mxu0 %v595
        %v784 = vpop.f32.mrf.mxu0
        %v785 = vadd.f32 0.0, %v784
        %v786 = vpop.f32.mrf.mxu0
        %787 = vmatprep.mubr.f32.mxu0 0.0
        %788 = vmatmul.mubr.f32.gmra.mxu0 %v598
        %v789 = vpop.f32.mrf.mxu0
        %v790 = vadd.f32 0.0, %v789
        %v791 = vpop.f32.mrf.mxu0
        %792 = vmatprep.mubr.f32.mxu0 0.0
        %793 = vmatmul.mubr.f32.gmra.mxu0 %v601
        %v794 = vpop.f32.mrf.mxu0
        %v795 = vadd.f32 0.0, %v794
        %v796 = vpop.f32.mrf.mxu0
        %797 = vmatprep.mubr.f32.mxu0 0.0
        %798 = vmatmul.mubr.f32.gmra.mxu0 %v604
        %v799 = vpop.f32.mrf.mxu0
        %v800 = vadd.f32 0.0, %v799
        %v801 = vpop.f32.mrf.mxu0
        %802 = vmatprep.mubr.f32.mxu0 0.0
        %803 = vmatmul.mubr.f32.gmra.mxu0 %v607
        %v804 = vpop.f32.mrf.mxu0
        %v805 = vadd.f32 0.0, %v804
        %v806 = vpop.f32.mrf.mxu0
        %807 = vmatprep.mubr.f32.mxu0 0.0
        %808 = vmatmul.mubr.f32.gmra.mxu0 %v610
        %v809 = vpop.f32.mrf.mxu0
        %v810 = vadd.f32 0.0, %v809
        %v811 = vpop.f32.mrf.mxu0
        %812 = vmatprep.mubr.f32.mxu0 0.0
        %813 = vmatmul.mubr.f32.gmra.mxu0 %v613
        %v814 = vpop.f32.mrf.mxu0
        %v815 = vadd.f32 0.0, %v814
        %v816 = vpop.f32.mrf.mxu0
        %817 = vmatprep.mubr.f32.mxu0 0.0
        %818 = vmatmul.mubr.f32.gmra.mxu0 %v616
        %v819 = vpop.f32.mrf.mxu0
        %v820 = vadd.f32 0.0, %v819
        %v821 = vpop.f32.mrf.mxu0
        %822 = vmatprep.mubr.f32.mxu0 0.0
        %823 = vmatmul.mubr.f32.gmra.mxu0 %v619
        %v824 = vpop.f32.mrf.mxu0
        %v825 = vadd.f32 0.0, %v824
        %v826 = vpop.f32.mrf.mxu0
        %827 = vmatprep.mubr.f32.mxu0 0.0
        %828 = vmatmul.mubr.f32.gmra.mxu0 %v622
        %v829 = vpop.f32.mrf.mxu0
        %v830 = vadd.f32 0.0, %v829
        %v831 = vpop.f32.mrf.mxu0
        %832 = vmatprep.mubr.f32.mxu0 0.0
        %833 = vmatmul.mubr.f32.gmra.mxu0 %v625
        %v834 = vpop.f32.mrf.mxu0
        %v835 = vadd.f32 0.0, %v834
        %v836 = vpop.f32.mrf.mxu0
        %837 = vmatprep.mubr.f32.mxu0 0.0
        %838 = vmatmul.mubr.f32.gmra.mxu0 %v628
        %v839 = vpop.f32.mrf.mxu0
        %v840 = vadd.f32 0.0, %v839
        %v841 = vpop.f32.mrf.mxu0
        %842 = vmatprep.mubr.f32.mxu0 0.0
        %843 = vmatmul.mubr.f32.gmra.mxu0 %v631
        %v844 = vpop.f32.mrf.mxu0
        %v845 = vadd.f32 0.0, %v844
        %v846 = vpop.f32.mrf.mxu0
        %847 = vmatprep.mubr.f32.mxu0 0.0
        %848 = vmatmul.mubr.f32.gmra.mxu0 %v634
        %v849 = vpop.f32.mrf.mxu0
        %v850 = vadd.f32 0.0, %v849
        %v851 = vpop.f32.mrf.mxu0
        %852 = vmatprep.mubr.f32.mxu0 0.0
        %853 = vmatmul.mubr.f32.gmra.mxu0 %v637
        %v854 = vpop.f32.mrf.mxu0
        %v855 = vadd.f32 0.0, %v854
        %v856 = vpop.f32.mrf.mxu0
        %857 = vmatprep.mubr.f32.mxu0 0.0
        %858 = vmatmul.mubr.f32.gmra.mxu0 %v640
        %v859 = vpop.f32.mrf.mxu0
        %v860 = vadd.f32 0.0, %v859
        %v861 = vpop.f32.mrf.mxu0
        %862 = vmatprep.mubr.f32.mxu0 0.0
        %863 = vmatmul.mubr.f32.gmra.mxu0 %v643
        %v864 = vpop.f32.mrf.mxu0
        %v865 = vadd.f32 0.0, %v864
        %v866 = vpop.f32.mrf.mxu0
        %867 = vmatprep.mubr.f32.mxu0 0.0
        %868 = vmatmul.mubr.f32.gmra.mxu0 %v646
        %v869 = vpop.f32.mrf.mxu0
        %v870 = vadd.f32 0.0, %v869
        %v871 = vpop.f32.mrf.mxu0
        %872 = vdwg.mxu0
        %873 = vrot.lane.b32.xlu0 %v389, 32
        %v874 = vpop.permute.xlu0 %873
        %875 = vrot.lane.b32.xlu0 %v394, 32
        %v876 = vpop.permute.xlu0 %875
        %877 = vrot.lane.b32.xlu0 %v399, 32
        %v878 = vpop.permute.xlu0 %877
        %879 = vrot.lane.b32.xlu0 %v404, 32
        %v880 = vpop.permute.xlu0 %879
        %881 = vrot.lane.b32.xlu0 %v409, 32
        %v882 = vpop.permute.xlu0 %881
        %883 = vrot.lane.b32.xlu0 %v414, 32
        %v884 = vpop.permute.xlu0 %883
        %885 = vrot.lane.b32.xlu0 %v419, 32
        %v886 = vpop.permute.xlu0 %885
        %887 = vrot.lane.b32.xlu0 %v424, 32
        %v888 = vpop.permute.xlu0 %887
        %889 = vrot.lane.b32.xlu0 %v429, 32
        %v890 = vpop.permute.xlu0 %889
        %891 = vrot.lane.b32.xlu0 %v434, 32
        %v892 = vpop.permute.xlu0 %891
        %893 = vrot.lane.b32.xlu0 %v439, 32
        %v894 = vpop.permute.xlu0 %893
        %895 = vrot.lane.b32.xlu0 %v444, 32
        %v896 = vpop.permute.xlu0 %895
        %897 = vrot.lane.b32.xlu0 %v449, 32
        %v898 = vpop.permute.xlu0 %897
        %899 = vrot.lane.b32.xlu0 %v454, 32
        %v900 = vpop.permute.xlu0 %899
        %901 = vrot.lane.b32.xlu0 %v459, 32
        %v902 = vpop.permute.xlu0 %901
        %903 = vrot.lane.b32.xlu0 %v464, 32
        %v904 = vpop.permute.xlu0 %903
        %905 = vrot.lane.b32.xlu0 %v469, 32
        %v906 = vpop.permute.xlu0 %905
        %907 = vrot.lane.b32.xlu0 %v474, 32
        %v908 = vpop.permute.xlu0 %907
        %909 = vrot.lane.b32.xlu0 %v479, 32
        %v910 = vpop.permute.xlu0 %909
        %911 = vrot.lane.b32.xlu0 %v484, 32
        %v912 = vpop.permute.xlu0 %911
        %913 = vrot.lane.b32.xlu0 %v489, 32
        %v914 = vpop.permute.xlu0 %913
        %915 = vrot.lane.b32.xlu0 %v494, 32
        %v916 = vpop.permute.xlu0 %915
        %917 = vrot.lane.b32.xlu0 %v499, 32
        %v918 = vpop.permute.xlu0 %917
        %919 = vrot.lane.b32.xlu0 %v504, 32
        %v920 = vpop.permute.xlu0 %919
        %921 = vrot.lane.b32.xlu0 %v509, 32
        %v922 = vpop.permute.xlu0 %921
        %923 = vrot.lane.b32.xlu0 %v514, 32
        %v924 = vpop.permute.xlu0 %923
        %925 = vrot.lane.b32.xlu0 %v519, 32
        %v926 = vpop.permute.xlu0 %925
        %927 = vrot.lane.b32.xlu0 %v524, 32
        %v928 = vpop.permute.xlu0 %927
        %929 = vrot.lane.b32.xlu0 %v529, 32
        %v930 = vpop.permute.xlu0 %929
        %931 = vrot.lane.b32.xlu0 %v534, 32
        %v932 = vpop.permute.xlu0 %931
        %933 = vrot.lane.b32.xlu0 %v539, 32
        %v934 = vpop.permute.xlu0 %933
        %935 = vrot.lane.b32.xlu0 %v544, 32
        %v936 = vpop.permute.xlu0 %935
        %969 = vrot.lane.b32.xlu0 %v389, 64
        %v970 = vpop.permute.xlu0 %969
        %971 = vrot.lane.b32.xlu0 %v394, 64
        %v972 = vpop.permute.xlu0 %971
        %973 = vrot.lane.b32.xlu0 %v399, 64
        %v974 = vpop.permute.xlu0 %973
        %975 = vrot.lane.b32.xlu0 %v404, 64
        %v976 = vpop.permute.xlu0 %975
        %977 = vrot.lane.b32.xlu0 %v409, 64
        %v978 = vpop.permute.xlu0 %977
        %979 = vrot.lane.b32.xlu0 %v414, 64
        %v980 = vpop.permute.xlu0 %979
        %981 = vrot.lane.b32.xlu0 %v419, 64
        %v982 = vpop.permute.xlu0 %981
        %983 = vrot.lane.b32.xlu0 %v424, 64
        %v984 = vpop.permute.xlu0 %983
        %985 = vrot.lane.b32.xlu0 %v429, 64
        %v986 = vpop.permute.xlu0 %985
        %987 = vrot.lane.b32.xlu0 %v434, 64
        %v988 = vpop.permute.xlu0 %987
        %989 = vrot.lane.b32.xlu0 %v439, 64
        %v990 = vpop.permute.xlu0 %989
        %991 = vrot.lane.b32.xlu0 %v444, 64
        %v992 = vpop.permute.xlu0 %991
        %993 = vrot.lane.b32.xlu0 %v449, 64
        %v994 = vpop.permute.xlu0 %993
        %995 = vrot.lane.b32.xlu0 %v454, 64
        %v996 = vpop.permute.xlu0 %995
        %997 = vrot.lane.b32.xlu0 %v459, 64
        %v998 = vpop.permute.xlu0 %997
        %999 = vrot.lane.b32.xlu0 %v464, 64
        %v1000 = vpop.permute.xlu0 %999
        %1001 = vrot.lane.b32.xlu0 %v469, 64
        %v1002 = vpop.permute.xlu0 %1001
        %1003 = vrot.lane.b32.xlu0 %v474, 64
        %v1004 = vpop.permute.xlu0 %1003
        %1005 = vrot.lane.b32.xlu0 %v479, 64
        %v1006 = vpop.permute.xlu0 %1005
        %1007 = vrot.lane.b32.xlu0 %v484, 64
        %v1008 = vpop.permute.xlu0 %1007
        %1009 = vrot.lane.b32.xlu0 %v489, 64
        %v1010 = vpop.permute.xlu0 %1009
        %1011 = vrot.lane.b32.xlu0 %v494, 64
        %v1012 = vpop.permute.xlu0 %1011
        %1013 = vrot.lane.b32.xlu0 %v499, 64
        %v1014 = vpop.permute.xlu0 %1013
        %1015 = vrot.lane.b32.xlu0 %v504, 64
        %v1016 = vpop.permute.xlu0 %1015
        %1017 = vrot.lane.b32.xlu0 %v509, 64
        %v1018 = vpop.permute.xlu0 %1017
        %1019 = vrot.lane.b32.xlu0 %v514, 64
        %v1020 = vpop.permute.xlu0 %1019
        %1021 = vrot.lane.b32.xlu0 %v519, 64
        %v1022 = vpop.permute.xlu0 %1021
        %1023 = vrot.lane.b32.xlu0 %v524, 64
        %v1024 = vpop.permute.xlu0 %1023
        %1025 = vrot.lane.b32.xlu0 %v529, 64
        %v1026 = vpop.permute.xlu0 %1025
        %1027 = vrot.lane.b32.xlu0 %v534, 64
        %v1028 = vpop.permute.xlu0 %1027
        %1029 = vrot.lane.b32.xlu0 %v539, 64
        %v1030 = vpop.permute.xlu0 %1029
        %1031 = vrot.lane.b32.xlu0 %v544, 64
        %v1032 = vpop.permute.xlu0 %1031
        %1065 = vrot.lane.b32.xlu0 %v389, 96
        %v1066 = vpop.permute.xlu0 %1065
        %1067 = vrot.lane.b32.xlu0 %v394, 96
        %v1068 = vpop.permute.xlu0 %1067
        %1069 = vrot.lane.b32.xlu0 %v399, 96
        %v1070 = vpop.permute.xlu0 %1069
        %1071 = vrot.lane.b32.xlu0 %v404, 96
        %v1072 = vpop.permute.xlu0 %1071
        %1073 = vrot.lane.b32.xlu0 %v409, 96
        %v1074 = vpop.permute.xlu0 %1073
        %1075 = vrot.lane.b32.xlu0 %v414, 96
        %v1076 = vpop.permute.xlu0 %1075
        %1077 = vrot.lane.b32.xlu0 %v419, 96
        %v1078 = vpop.permute.xlu0 %1077
        %1079 = vrot.lane.b32.xlu0 %v424, 96
        %v1080 = vpop.permute.xlu0 %1079
        %1081 = vrot.lane.b32.xlu0 %v429, 96
        %v1082 = vpop.permute.xlu0 %1081
        %1083 = vrot.lane.b32.xlu0 %v434, 96
        %v1084 = vpop.permute.xlu0 %1083
        %1085 = vrot.lane.b32.xlu0 %v439, 96
        %v1086 = vpop.permute.xlu0 %1085
        %1087 = vrot.lane.b32.xlu0 %v444, 96
        %v1088 = vpop.permute.xlu0 %1087
        %1089 = vrot.lane.b32.xlu0 %v449, 96
        %v1090 = vpop.permute.xlu0 %1089
        %1091 = vrot.lane.b32.xlu0 %v454, 96
        %v1092 = vpop.permute.xlu0 %1091
        %1093 = vrot.lane.b32.xlu0 %v459, 96
        %v1094 = vpop.permute.xlu0 %1093
        %1095 = vrot.lane.b32.xlu0 %v464, 96
        %v1096 = vpop.permute.xlu0 %1095
        %1097 = vrot.lane.b32.xlu0 %v469, 96
        %v1098 = vpop.permute.xlu0 %1097
        %1099 = vrot.lane.b32.xlu0 %v474, 96
        %v1100 = vpop.permute.xlu0 %1099
        %1101 = vrot.lane.b32.xlu0 %v479, 96
        %v1102 = vpop.permute.xlu0 %1101
        %1103 = vrot.lane.b32.xlu0 %v484, 96
        %v1104 = vpop.permute.xlu0 %1103
        %1105 = vrot.lane.b32.xlu0 %v489, 96
        %v1106 = vpop.permute.xlu0 %1105
        %1107 = vrot.lane.b32.xlu0 %v494, 96
        %v1108 = vpop.permute.xlu0 %1107
        %1109 = vrot.lane.b32.xlu0 %v499, 96
        %v1110 = vpop.permute.xlu0 %1109
        %1111 = vrot.lane.b32.xlu0 %v504, 96
        %v1112 = vpop.permute.xlu0 %1111
        %1113 = vrot.lane.b32.xlu0 %v509, 96
        %v1114 = vpop.permute.xlu0 %1113
        %1115 = vrot.lane.b32.xlu0 %v514, 96
        %v1116 = vpop.permute.xlu0 %1115
        %1117 = vrot.lane.b32.xlu0 %v519, 96
        %v1118 = vpop.permute.xlu0 %1117
        %1119 = vrot.lane.b32.xlu0 %v524, 96
        %v1120 = vpop.permute.xlu0 %1119
        %1121 = vrot.lane.b32.xlu0 %v529, 96
        %v1122 = vpop.permute.xlu0 %1121
        %1123 = vrot.lane.b32.xlu0 %v534, 96
        %v1124 = vpop.permute.xlu0 %1123
        %1125 = vrot.lane.b32.xlu0 %v539, 96
        %v1126 = vpop.permute.xlu0 %1125
        %1127 = vrot.lane.b32.xlu0 %v544, 96
        %v1128 = vpop.permute.xlu0 %1127
        %1161 = vrot.lane.b32.xlu0 %v389, 8
        %v1162 = vpop.permute.xlu0 %1161
        %1163 = vrot.lane.b32.xlu0 %v394, 8
        %v1164 = vpop.permute.xlu0 %1163
        %1165 = vrot.lane.b32.xlu0 %v399, 8
        %v1166 = vpop.permute.xlu0 %1165
        %1167 = vrot.lane.b32.xlu0 %v404, 8
        %v1168 = vpop.permute.xlu0 %1167
        %1169 = vrot.lane.b32.xlu0 %v409, 8
        %v1170 = vpop.permute.xlu0 %1169
        %1171 = vrot.lane.b32.xlu0 %v414, 8
        %v1172 = vpop.permute.xlu0 %1171
        %1173 = vrot.lane.b32.xlu0 %v419, 8
        %v1174 = vpop.permute.xlu0 %1173
        %1175 = vrot.lane.b32.xlu0 %v424, 8
        %v1176 = vpop.permute.xlu0 %1175
        %1177 = vrot.lane.b32.xlu0 %v429, 8
        %v1178 = vpop.permute.xlu0 %1177
        %1179 = vrot.lane.b32.xlu0 %v434, 8
        %v1180 = vpop.permute.xlu0 %1179
        %1181 = vrot.lane.b32.xlu0 %v439, 8
        %v1182 = vpop.permute.xlu0 %1181
        %1183 = vrot.lane.b32.xlu0 %v444, 8
        %v1184 = vpop.permute.xlu0 %1183
        %1185 = vrot.lane.b32.xlu0 %v449, 8
        %v1186 = vpop.permute.xlu0 %1185
        %1187 = vrot.lane.b32.xlu0 %v454, 8
        %v1188 = vpop.permute.xlu0 %1187
        %1189 = vrot.lane.b32.xlu0 %v459, 8
        %v1190 = vpop.permute.xlu0 %1189
        %1191 = vrot.lane.b32.xlu0 %v464, 8
        %v1192 = vpop.permute.xlu0 %1191
        %1193 = vrot.lane.b32.xlu0 %v469, 8
        %v1194 = vpop.permute.xlu0 %1193
        %1195 = vrot.lane.b32.xlu0 %v474, 8
        %v1196 = vpop.permute.xlu0 %1195
        %1197 = vrot.lane.b32.xlu0 %v479, 8
        %v1198 = vpop.permute.xlu0 %1197
        %1199 = vrot.lane.b32.xlu0 %v484, 8
        %v1200 = vpop.permute.xlu0 %1199
        %1201 = vrot.lane.b32.xlu0 %v489, 8
        %v1202 = vpop.permute.xlu0 %1201
        %1203 = vrot.lane.b32.xlu0 %v494, 8
        %v1204 = vpop.permute.xlu0 %1203
        %1205 = vrot.lane.b32.xlu0 %v499, 8
        %v1206 = vpop.permute.xlu0 %1205
        %1207 = vrot.lane.b32.xlu0 %v504, 8
        %v1208 = vpop.permute.xlu0 %1207
        %1209 = vrot.lane.b32.xlu0 %v509, 8
        %v1210 = vpop.permute.xlu0 %1209
        %1211 = vrot.lane.b32.xlu0 %v514, 8
        %v1212 = vpop.permute.xlu0 %1211
        %1213 = vrot.lane.b32.xlu0 %v519, 8
        %v1214 = vpop.permute.xlu0 %1213
        %1215 = vrot.lane.b32.xlu0 %v524, 8
        %v1216 = vpop.permute.xlu0 %1215
        %1217 = vrot.lane.b32.xlu0 %v529, 8
        %v1218 = vpop.permute.xlu0 %1217
        %1219 = vrot.lane.b32.xlu0 %v534, 8
        %v1220 = vpop.permute.xlu0 %1219
        %1221 = vrot.lane.b32.xlu0 %v539, 8
        %v1222 = vpop.permute.xlu0 %1221
        %1223 = vrot.lane.b32.xlu0 %v544, 8
        %v1224 = vpop.permute.xlu0 %1223
        %1257 = vrot.lane.b32.xlu0 %v389, 40
        %v1258 = vpop.permute.xlu0 %1257
        %1259 = vrot.lane.b32.xlu0 %v394, 40
        %v1260 = vpop.permute.xlu0 %1259
        %1261 = vrot.lane.b32.xlu0 %v399, 40
        %v1262 = vpop.permute.xlu0 %1261
        %1263 = vrot.lane.b32.xlu0 %v404, 40
        %v1264 = vpop.permute.xlu0 %1263
        %1265 = vrot.lane.b32.xlu0 %v409, 40
        %v1266 = vpop.permute.xlu0 %1265
        %1267 = vrot.lane.b32.xlu0 %v414, 40
        %v1268 = vpop.permute.xlu0 %1267
        %1269 = vrot.lane.b32.xlu0 %v419, 40
        %v1270 = vpop.permute.xlu0 %1269
        %1271 = vrot.lane.b32.xlu0 %v424, 40
        %v1272 = vpop.permute.xlu0 %1271
        %1273 = vrot.lane.b32.xlu0 %v429, 40
        %v1274 = vpop.permute.xlu0 %1273
        %1275 = vrot.lane.b32.xlu0 %v434, 40
        %v1276 = vpop.permute.xlu0 %1275
        %1277 = vrot.lane.b32.xlu0 %v439, 40
        %v1278 = vpop.permute.xlu0 %1277
        %1279 = vrot.lane.b32.xlu0 %v444, 40
        %v1280 = vpop.permute.xlu0 %1279
        %1281 = vrot.lane.b32.xlu0 %v449, 40
        %v1282 = vpop.permute.xlu0 %1281
        %1283 = vrot.lane.b32.xlu0 %v454, 40
        %v1284 = vpop.permute.xlu0 %1283
        %1285 = vrot.lane.b32.xlu0 %v459, 40
        %v1286 = vpop.permute.xlu0 %1285
        %1287 = vrot.lane.b32.xlu0 %v464, 40
        %v1288 = vpop.permute.xlu0 %1287
        %1289 = vrot.lane.b32.xlu0 %v469, 40
        %v1290 = vpop.permute.xlu0 %1289
        %1291 = vrot.lane.b32.xlu0 %v474, 40
        %v1292 = vpop.permute.xlu0 %1291
        %1293 = vrot.lane.b32.xlu0 %v479, 40
        %v1294 = vpop.permute.xlu0 %1293
        %1295 = vrot.lane.b32.xlu0 %v484, 40
        %v1296 = vpop.permute.xlu0 %1295
        %1297 = vrot.lane.b32.xlu0 %v489, 40
        %v1298 = vpop.permute.xlu0 %1297
        %1299 = vrot.lane.b32.xlu0 %v494, 40
        %v1300 = vpop.permute.xlu0 %1299
        %1301 = vrot.lane.b32.xlu0 %v499, 40
        %v1302 = vpop.permute.xlu0 %1301
        %1303 = vrot.lane.b32.xlu0 %v504, 40
        %v1304 = vpop.permute.xlu0 %1303
        %1305 = vrot.lane.b32.xlu0 %v509, 40
        %v1306 = vpop.permute.xlu0 %1305
        %1307 = vrot.lane.b32.xlu0 %v514, 40
        %v1308 = vpop.permute.xlu0 %1307
        %1309 = vrot.lane.b32.xlu0 %v519, 40
        %v1310 = vpop.permute.xlu0 %1309
        %1311 = vrot.lane.b32.xlu0 %v524, 40
        %v1312 = vpop.permute.xlu0 %1311
        %1313 = vrot.lane.b32.xlu0 %v529, 40
        %v1314 = vpop.permute.xlu0 %1313
        %1315 = vrot.lane.b32.xlu0 %v534, 40
        %v1316 = vpop.permute.xlu0 %1315
        %1317 = vrot.lane.b32.xlu0 %v539, 40
        %v1318 = vpop.permute.xlu0 %1317
        %1319 = vrot.lane.b32.xlu0 %v544, 40
        %v1320 = vpop.permute.xlu0 %1319
        %1353 = vrot.lane.b32.xlu0 %v389, 72
        %v1354 = vpop.permute.xlu0 %1353
        %1355 = vrot.lane.b32.xlu0 %v394, 72
        %v1356 = vpop.permute.xlu0 %1355
        %1357 = vrot.lane.b32.xlu0 %v399, 72
        %v1358 = vpop.permute.xlu0 %1357
        %1359 = vrot.lane.b32.xlu0 %v404, 72
        %v1360 = vpop.permute.xlu0 %1359
        %1361 = vrot.lane.b32.xlu0 %v409, 72
        %v1362 = vpop.permute.xlu0 %1361
        %1363 = vrot.lane.b32.xlu0 %v414, 72
        %v1364 = vpop.permute.xlu0 %1363
        %1365 = vrot.lane.b32.xlu0 %v419, 72
        %v1366 = vpop.permute.xlu0 %1365
        %1367 = vrot.lane.b32.xlu0 %v424, 72
        %v1368 = vpop.permute.xlu0 %1367
        %1369 = vrot.lane.b32.xlu0 %v429, 72
        %v1370 = vpop.permute.xlu0 %1369
        %1371 = vrot.lane.b32.xlu0 %v434, 72
        %v1372 = vpop.permute.xlu0 %1371
        %1373 = vrot.lane.b32.xlu0 %v439, 72
        %v1374 = vpop.permute.xlu0 %1373
        %1375 = vrot.lane.b32.xlu0 %v444, 72
        %v1376 = vpop.permute.xlu0 %1375
        %1377 = vrot.lane.b32.xlu0 %v449, 72
        %v1378 = vpop.permute.xlu0 %1377
        %1379 = vrot.lane.b32.xlu0 %v454, 72
        %v1380 = vpop.permute.xlu0 %1379
        %1381 = vrot.lane.b32.xlu0 %v459, 72
        %v1382 = vpop.permute.xlu0 %1381
        %1383 = vrot.lane.b32.xlu0 %v464, 72
        %v1384 = vpop.permute.xlu0 %1383
        %1385 = vrot.lane.b32.xlu0 %v469, 72
        %v1386 = vpop.permute.xlu0 %1385
        %1387 = vrot.lane.b32.xlu0 %v474, 72
        %v1388 = vpop.permute.xlu0 %1387
        %1389 = vrot.lane.b32.xlu0 %v479, 72
        %v1390 = vpop.permute.xlu0 %1389
        %1391 = vrot.lane.b32.xlu0 %v484, 72
        %v1392 = vpop.permute.xlu0 %1391
        %1393 = vrot.lane.b32.xlu0 %v489, 72
        %v1394 = vpop.permute.xlu0 %1393
        %1395 = vrot.lane.b32.xlu0 %v494, 72
        %v1396 = vpop.permute.xlu0 %1395
        %1397 = vrot.lane.b32.xlu0 %v499, 72
        %v1398 = vpop.permute.xlu0 %1397
        %1399 = vrot.lane.b32.xlu0 %v504, 72
        %v1400 = vpop.permute.xlu0 %1399
        %1401 = vrot.lane.b32.xlu0 %v509, 72
        %v1402 = vpop.permute.xlu0 %1401
        %1403 = vrot.lane.b32.xlu0 %v514, 72
        %v1404 = vpop.permute.xlu0 %1403
        %1405 = vrot.lane.b32.xlu0 %v519, 72
        %v1406 = vpop.permute.xlu0 %1405
        %1407 = vrot.lane.b32.xlu0 %v524, 72
        %v1408 = vpop.permute.xlu0 %1407
        %1409 = vrot.lane.b32.xlu0 %v529, 72
        %v1410 = vpop.permute.xlu0 %1409
        %1411 = vrot.lane.b32.xlu0 %v534, 72
        %v1412 = vpop.permute.xlu0 %1411
        %1413 = vrot.lane.b32.xlu0 %v539, 72
        %v1414 = vpop.permute.xlu0 %1413
        %1415 = vrot.lane.b32.xlu0 %v544, 72
        %v1416 = vpop.permute.xlu0 %1415
        %1449 = vrot.lane.b32.xlu0 %v389, 104
        %v1450 = vpop.permute.xlu0 %1449
        %1451 = vrot.lane.b32.xlu0 %v394, 104
        %v1452 = vpop.permute.xlu0 %1451
        %1453 = vrot.lane.b32.xlu0 %v399, 104
        %v1454 = vpop.permute.xlu0 %1453
        %1455 = vrot.lane.b32.xlu0 %v404, 104
        %v1456 = vpop.permute.xlu0 %1455
        %1457 = vrot.lane.b32.xlu0 %v409, 104
        %v1458 = vpop.permute.xlu0 %1457
        %1459 = vrot.lane.b32.xlu0 %v414, 104
        %v1460 = vpop.permute.xlu0 %1459
        %1461 = vrot.lane.b32.xlu0 %v419, 104
        %v1462 = vpop.permute.xlu0 %1461
        %1463 = vrot.lane.b32.xlu0 %v424, 104
        %v1464 = vpop.permute.xlu0 %1463
        %1465 = vrot.lane.b32.xlu0 %v429, 104
        %v1466 = vpop.permute.xlu0 %1465
        %1467 = vrot.lane.b32.xlu0 %v434, 104
        %v1468 = vpop.permute.xlu0 %1467
        %1469 = vrot.lane.b32.xlu0 %v439, 104
        %v1470 = vpop.permute.xlu0 %1469
        %1471 = vrot.lane.b32.xlu0 %v444, 104
        %v1472 = vpop.permute.xlu0 %1471
        %1473 = vrot.lane.b32.xlu0 %v449, 104
        %v1474 = vpop.permute.xlu0 %1473
        %1475 = vrot.lane.b32.xlu0 %v454, 104
        %v1476 = vpop.permute.xlu0 %1475
        %1477 = vrot.lane.b32.xlu0 %v459, 104
        %v1478 = vpop.permute.xlu0 %1477
        %1479 = vrot.lane.b32.xlu0 %v464, 104
        %v1480 = vpop.permute.xlu0 %1479
        %1481 = vrot.lane.b32.xlu0 %v469, 104
        %v1482 = vpop.permute.xlu0 %1481
        %1483 = vrot.lane.b32.xlu0 %v474, 104
        %v1484 = vpop.permute.xlu0 %1483
        %1485 = vrot.lane.b32.xlu0 %v479, 104
        %v1486 = vpop.permute.xlu0 %1485
        %1487 = vrot.lane.b32.xlu0 %v484, 104
        %v1488 = vpop.permute.xlu0 %1487
        %1489 = vrot.lane.b32.xlu0 %v489, 104
        %v1490 = vpop.permute.xlu0 %1489
        %1491 = vrot.lane.b32.xlu0 %v494, 104
        %v1492 = vpop.permute.xlu0 %1491
        %1493 = vrot.lane.b32.xlu0 %v499, 104
        %v1494 = vpop.permute.xlu0 %1493
        %1495 = vrot.lane.b32.xlu0 %v504, 104
        %v1496 = vpop.permute.xlu0 %1495
        %1497 = vrot.lane.b32.xlu0 %v509, 104
        %v1498 = vpop.permute.xlu0 %1497
        %1499 = vrot.lane.b32.xlu0 %v514, 104
        %v1500 = vpop.permute.xlu0 %1499
        %1501 = vrot.lane.b32.xlu0 %v519, 104
        %v1502 = vpop.permute.xlu0 %1501
        %1503 = vrot.lane.b32.xlu0 %v524, 104
        %v1504 = vpop.permute.xlu0 %1503
        %1505 = vrot.lane.b32.xlu0 %v529, 104
        %v1506 = vpop.permute.xlu0 %1505
        %1507 = vrot.lane.b32.xlu0 %v534, 104
        %v1508 = vpop.permute.xlu0 %1507
        %1509 = vrot.lane.b32.xlu0 %v539, 104
        %v1510 = vpop.permute.xlu0 %1509
        %1511 = vrot.lane.b32.xlu0 %v544, 104
        %v1512 = vpop.permute.xlu0 %1511
        %1577 = vrot.lane.b32.xlu0 %v715, 40
        %v1578 = vpop.permute.xlu0 %1577
        %1579 = vrot.lane.b32.xlu0 %v720, 40
        %v1580 = vpop.permute.xlu0 %1579
        %1581 = vrot.lane.b32.xlu0 %v725, 40
        %v1582 = vpop.permute.xlu0 %1581
        %1583 = vrot.lane.b32.xlu0 %v730, 40
        %v1584 = vpop.permute.xlu0 %1583
        %1585 = vrot.lane.b32.xlu0 %v735, 40
        %v1586 = vpop.permute.xlu0 %1585
        %1587 = vrot.lane.b32.xlu0 %v740, 40
        %v1588 = vpop.permute.xlu0 %1587
        %1589 = vrot.lane.b32.xlu0 %v745, 40
        %v1590 = vpop.permute.xlu0 %1589
        %1591 = vrot.lane.b32.xlu0 %v750, 40
        %v1592 = vpop.permute.xlu0 %1591
        %1593 = vrot.lane.b32.xlu0 %v755, 40
        %v1594 = vpop.permute.xlu0 %1593
        %1595 = vrot.lane.b32.xlu0 %v760, 40
        %v1596 = vpop.permute.xlu0 %1595
        %1597 = vrot.lane.b32.xlu0 %v765, 40
        %v1598 = vpop.permute.xlu0 %1597
        %1599 = vrot.lane.b32.xlu0 %v770, 40
        %v1600 = vpop.permute.xlu0 %1599
        %1601 = vrot.lane.b32.xlu0 %v775, 40
        %v1602 = vpop.permute.xlu0 %1601
        %1603 = vrot.lane.b32.xlu0 %v780, 40
        %v1604 = vpop.permute.xlu0 %1603
        %1605 = vrot.lane.b32.xlu0 %v785, 40
        %v1606 = vpop.permute.xlu0 %1605
        %1607 = vrot.lane.b32.xlu0 %v790, 40
        %v1608 = vpop.permute.xlu0 %1607
        %1609 = vrot.lane.b32.xlu0 %v795, 40
        %v1610 = vpop.permute.xlu0 %1609
        %1611 = vrot.lane.b32.xlu0 %v800, 40
        %v1612 = vpop.permute.xlu0 %1611
        %1613 = vrot.lane.b32.xlu0 %v805, 40
        %v1614 = vpop.permute.xlu0 %1613
        %1615 = vrot.lane.b32.xlu0 %v810, 40
        %v1616 = vpop.permute.xlu0 %1615
        %1617 = vrot.lane.b32.xlu0 %v815, 40
        %v1618 = vpop.permute.xlu0 %1617
        %1619 = vrot.lane.b32.xlu0 %v820, 40
        %v1620 = vpop.permute.xlu0 %1619
        %1621 = vrot.lane.b32.xlu0 %v825, 40
        %v1622 = vpop.permute.xlu0 %1621
        %1623 = vrot.lane.b32.xlu0 %v830, 40
        %v1624 = vpop.permute.xlu0 %1623
        %1625 = vrot.lane.b32.xlu0 %v835, 40
        %v1626 = vpop.permute.xlu0 %1625
        %1627 = vrot.lane.b32.xlu0 %v840, 40
        %v1628 = vpop.permute.xlu0 %1627
        %1629 = vrot.lane.b32.xlu0 %v845, 40
        %v1630 = vpop.permute.xlu0 %1629
        %1631 = vrot.lane.b32.xlu0 %v850, 40
        %v1632 = vpop.permute.xlu0 %1631
        %1633 = vrot.lane.b32.xlu0 %v855, 40
        %v1634 = vpop.permute.xlu0 %1633
        %1635 = vrot.lane.b32.xlu0 %v860, 40
        %v1636 = vpop.permute.xlu0 %1635
        %1637 = vrot.lane.b32.xlu0 %v865, 40
        %v1638 = vpop.permute.xlu0 %1637
        %1639 = vrot.lane.b32.xlu0 %v870, 40
        %v1640 = vpop.permute.xlu0 %1639
        %v1673 = vsel %vm551, %v389, %v874
        %v1674 = vsel %vm551, %v394, %v876
        %v1675 = vsel %vm551, %v399, %v878
        %v1676 = vsel %vm551, %v404, %v880
        %v1677 = vsel %vm551, %v409, %v882
        %v1678 = vsel %vm551, %v414, %v884
        %v1679 = vsel %vm551, %v419, %v886
        %v1680 = vsel %vm551, %v424, %v888
        %v1681 = vsel %vm551, %v429, %v890
        %v1682 = vsel %vm551, %v434, %v892
        %v1683 = vsel %vm551, %v439, %v894
        %v1684 = vsel %vm551, %v444, %v896
        %v1685 = vsel %vm551, %v449, %v898
        %v1686 = vsel %vm551, %v454, %v900
        %v1687 = vsel %vm551, %v459, %v902
        %v1688 = vsel %vm551, %v464, %v904
        %v1689 = vsel %vm551, %v469, %v906
        %v1690 = vsel %vm551, %v474, %v908
        %v1691 = vsel %vm551, %v479, %v910
        %v1692 = vsel %vm551, %v484, %v912
        %v1693 = vsel %vm551, %v489, %v914
        %v1694 = vsel %vm551, %v494, %v916
        %v1695 = vsel %vm551, %v499, %v918
        %v1696 = vsel %vm551, %v504, %v920
        %v1697 = vsel %vm551, %v509, %v922
        %v1698 = vsel %vm551, %v514, %v924
        %v1699 = vsel %vm551, %v519, %v926
        %v1700 = vsel %vm551, %v524, %v928
        %v1701 = vsel %vm551, %v529, %v930
        %v1702 = vsel %vm551, %v534, %v932
        %v1703 = vsel %vm551, %v539, %v934
        %v1704 = vsel %vm551, %v544, %v936
        %vm1705 = vcmask 523264
        %v1706 = vsel %vm1705, %v1673, %v970
        %v1707 = vsel %vm1705, %v1674, %v972
        %v1708 = vsel %vm1705, %v1675, %v974
        %v1709 = vsel %vm1705, %v1676, %v976
        %v1710 = vsel %vm1705, %v1677, %v978
        %v1711 = vsel %vm1705, %v1678, %v980
        %v1712 = vsel %vm1705, %v1679, %v982
        %v1713 = vsel %vm1705, %v1680, %v984
        %v1714 = vsel %vm1705, %v1681, %v986
        %v1715 = vsel %vm1705, %v1682, %v988
        %v1716 = vsel %vm1705, %v1683, %v990
        %v1717 = vsel %vm1705, %v1684, %v992
        %v1718 = vsel %vm1705, %v1685, %v994
        %v1719 = vsel %vm1705, %v1686, %v996
        %v1720 = vsel %vm1705, %v1687, %v998
        %v1721 = vsel %vm1705, %v1688, %v1000
        %v1722 = vsel %vm1705, %v1689, %v1002
        %v1723 = vsel %vm1705, %v1690, %v1004
        %v1724 = vsel %vm1705, %v1691, %v1006
        %v1725 = vsel %vm1705, %v1692, %v1008
        %v1726 = vsel %vm1705, %v1693, %v1010
        %v1727 = vsel %vm1705, %v1694, %v1012
        %v1728 = vsel %vm1705, %v1695, %v1014
        %v1729 = vsel %vm1705, %v1696, %v1016
        %v1730 = vsel %vm1705, %v1697, %v1018
        %v1731 = vsel %vm1705, %v1698, %v1020
        %v1732 = vsel %vm1705, %v1699, %v1022
        %v1733 = vsel %vm1705, %v1700, %v1024
        %v1734 = vsel %vm1705, %v1701, %v1026
        %v1735 = vsel %vm1705, %v1702, %v1028
        %v1736 = vsel %vm1705, %v1703, %v1030
        %v1737 = vsel %vm1705, %v1704, %v1032
        %vm1738 = vcmask 785408
        %v1739 = vsel %vm1738, %v1706, %v1066
        %v1740 = vsel %vm1738, %v1707, %v1068
        %v1741 = vsel %vm1738, %v1708, %v1070
        %v1742 = vsel %vm1738, %v1709, %v1072
        %v1743 = vsel %vm1738, %v1710, %v1074
        %v1744 = vsel %vm1738, %v1711, %v1076
        %v1745 = vsel %vm1738, %v1712, %v1078
        %v1746 = vsel %vm1738, %v1713, %v1080
        %v1747 = vsel %vm1738, %v1714, %v1082
        %v1748 = vsel %vm1738, %v1715, %v1084
        %v1749 = vsel %vm1738, %v1716, %v1086
        %v1750 = vsel %vm1738, %v1717, %v1088
        %v1751 = vsel %vm1738, %v1718, %v1090
        %v1752 = vsel %vm1738, %v1719, %v1092
        %v1753 = vsel %vm1738, %v1720, %v1094
        %v1754 = vsel %vm1738, %v1721, %v1096
        %v1755 = vsel %vm1738, %v1722, %v1098
        %v1756 = vsel %vm1738, %v1723, %v1100
        %v1757 = vsel %vm1738, %v1724, %v1102
        %v1758 = vsel %vm1738, %v1725, %v1104
        %v1759 = vsel %vm1738, %v1726, %v1106
        %v1760 = vsel %vm1738, %v1727, %v1108
        %v1761 = vsel %vm1738, %v1728, %v1110
        %v1762 = vsel %vm1738, %v1729, %v1112
        %v1763 = vsel %vm1738, %v1730, %v1114
        %v1764 = vsel %vm1738, %v1731, %v1116
        %v1765 = vsel %vm1738, %v1732, %v1118
        %v1766 = vsel %vm1738, %v1733, %v1120
        %v1767 = vsel %vm1738, %v1734, %v1122
        %v1768 = vsel %vm1738, %v1735, %v1124
        %v1769 = vsel %vm1738, %v1736, %v1126
        %v1770 = vsel %vm1738, %v1737, %v1128
        %vm1771 = vcmask 64512
        %v1772 = vsel %vm1771, %v715, %v1162
        %v1773 = vsel %vm1771, %v720, %v1164
        %v1774 = vsel %vm1771, %v725, %v1166
        %v1775 = vsel %vm1771, %v730, %v1168
        %v1776 = vsel %vm1771, %v735, %v1170
        %v1777 = vsel %vm1771, %v740, %v1172
        %v1778 = vsel %vm1771, %v745, %v1174
        %v1779 = vsel %vm1771, %v750, %v1176
        %v1780 = vsel %vm1771, %v755, %v1178
        %v1781 = vsel %vm1771, %v760, %v1180
        %v1782 = vsel %vm1771, %v765, %v1182
        %v1783 = vsel %vm1771, %v770, %v1184
        %v1784 = vsel %vm1771, %v775, %v1186
        %v1785 = vsel %vm1771, %v780, %v1188
        %v1786 = vsel %vm1771, %v785, %v1190
        %v1787 = vsel %vm1771, %v790, %v1192
        %v1788 = vsel %vm1771, %v795, %v1194
        %v1789 = vsel %vm1771, %v800, %v1196
        %v1790 = vsel %vm1771, %v805, %v1198
        %v1791 = vsel %vm1771, %v810, %v1200
        %v1792 = vsel %vm1771, %v815, %v1202
        %v1793 = vsel %vm1771, %v820, %v1204
        %v1794 = vsel %vm1771, %v825, %v1206
        %v1795 = vsel %vm1771, %v830, %v1208
        %v1796 = vsel %vm1771, %v835, %v1210
        %v1797 = vsel %vm1771, %v840, %v1212
        %v1798 = vsel %vm1771, %v845, %v1214
        %v1799 = vsel %vm1771, %v850, %v1216
        %v1800 = vsel %vm1771, %v855, %v1218
        %v1801 = vsel %vm1771, %v860, %v1220
        %v1802 = vsel %vm1771, %v865, %v1222
        %v1803 = vsel %vm1771, %v870, %v1224
        %vm1804 = vcmask 326656
        %v1805 = vsel %vm1804, %v1772, %v1258
        %v1806 = vsel %vm1804, %v1773, %v1260
        %v1807 = vsel %vm1804, %v1774, %v1262
        %v1808 = vsel %vm1804, %v1775, %v1264
        %v1809 = vsel %vm1804, %v1776, %v1266
        %v1810 = vsel %vm1804, %v1777, %v1268
        %v1811 = vsel %vm1804, %v1778, %v1270
        %v1812 = vsel %vm1804, %v1779, %v1272
        %v1813 = vsel %vm1804, %v1780, %v1274
        %v1814 = vsel %vm1804, %v1781, %v1276
        %v1815 = vsel %vm1804, %v1782, %v1278
        %v1816 = vsel %vm1804, %v1783, %v1280
        %v1817 = vsel %vm1804, %v1784, %v1282
        %v1818 = vsel %vm1804, %v1785, %v1284
        %v1819 = vsel %vm1804, %v1786, %v1286
        %v1820 = vsel %vm1804, %v1787, %v1288
        %v1821 = vsel %vm1804, %v1788, %v1290
        %v1822 = vsel %vm1804, %v1789, %v1292
        %v1823 = vsel %vm1804, %v1790, %v1294
        %v1824 = vsel %vm1804, %v1791, %v1296
        %v1825 = vsel %vm1804, %v1792, %v1298
        %v1826 = vsel %vm1804, %v1793, %v1300
        %v1827 = vsel %vm1804, %v1794, %v1302
        %v1828 = vsel %vm1804, %v1795, %v1304
        %v1829 = vsel %vm1804, %v1796, %v1306
        %v1830 = vsel %vm1804, %v1797, %v1308
        %v1831 = vsel %vm1804, %v1798, %v1310
        %v1832 = vsel %vm1804, %v1799, %v1312
        %v1833 = vsel %vm1804, %v1800, %v1314
        %v1834 = vsel %vm1804, %v1801, %v1316
        %v1835 = vsel %vm1804, %v1802, %v1318
        %v1836 = vsel %vm1804, %v1803, %v1320
        %vm1837 = vcmask 588800
        %v1838 = vsel %vm1837, %v1805, %v1354
        %v1839 = vsel %vm1837, %v1806, %v1356
        %v1840 = vsel %vm1837, %v1807, %v1358
        %v1841 = vsel %vm1837, %v1808, %v1360
        %v1842 = vsel %vm1837, %v1809, %v1362
        %v1843 = vsel %vm1837, %v1810, %v1364
        %v1844 = vsel %vm1837, %v1811, %v1366
        %v1845 = vsel %vm1837, %v1812, %v1368
        %v1846 = vsel %vm1837, %v1813, %v1370
        %v1847 = vsel %vm1837, %v1814, %v1372
        %v1848 = vsel %vm1837, %v1815, %v1374
        %v1849 = vsel %vm1837, %v1816, %v1376
        %v1850 = vsel %vm1837, %v1817, %v1378
        %v1851 = vsel %vm1837, %v1818, %v1380
        %v1852 = vsel %vm1837, %v1819, %v1382
        %v1853 = vsel %vm1837, %v1820, %v1384
        %v1854 = vsel %vm1837, %v1821, %v1386
        %v1855 = vsel %vm1837, %v1822, %v1388
        %v1856 = vsel %vm1837, %v1823, %v1390
        %v1857 = vsel %vm1837, %v1824, %v1392
        %v1858 = vsel %vm1837, %v1825, %v1394
        %v1859 = vsel %vm1837, %v1826, %v1396
        %v1860 = vsel %vm1837, %v1827, %v1398
        %v1861 = vsel %vm1837, %v1828, %v1400
        %v1862 = vsel %vm1837, %v1829, %v1402
        %v1863 = vsel %vm1837, %v1830, %v1404
        %v1864 = vsel %vm1837, %v1831, %v1406
        %v1865 = vsel %vm1837, %v1832, %v1408
        %v1866 = vsel %vm1837, %v1833, %v1410
        %v1867 = vsel %vm1837, %v1834, %v1412
        %v1868 = vsel %vm1837, %v1835, %v1414
        %v1869 = vsel %vm1837, %v1836, %v1416
        %vm1870 = vcmask 850944
        %v1871 = vsel %vm1870, %v1838, %v1450
        %v1872 = vsel %vm1870, %v1839, %v1452
        %v1873 = vsel %vm1870, %v1840, %v1454
        %v1874 = vsel %vm1870, %v1841, %v1456
        %v1875 = vsel %vm1870, %v1842, %v1458
        %v1876 = vsel %vm1870, %v1843, %v1460
        %v1877 = vsel %vm1870, %v1844, %v1462
        %v1878 = vsel %vm1870, %v1845, %v1464
        %v1879 = vsel %vm1870, %v1846, %v1466
        %v1880 = vsel %vm1870, %v1847, %v1468
        %v1881 = vsel %vm1870, %v1848, %v1470
        %v1882 = vsel %vm1870, %v1849, %v1472
        %v1883 = vsel %vm1870, %v1850, %v1474
        %v1884 = vsel %vm1870, %v1851, %v1476
        %v1885 = vsel %vm1870, %v1852, %v1478
        %v1886 = vsel %vm1870, %v1853, %v1480
        %v1887 = vsel %vm1870, %v1854, %v1482
        %v1888 = vsel %vm1870, %v1855, %v1484
        %v1889 = vsel %vm1870, %v1856, %v1486
        %v1890 = vsel %vm1870, %v1857, %v1488
        %v1891 = vsel %vm1870, %v1858, %v1490
        %v1892 = vsel %vm1870, %v1859, %v1492
        %v1893 = vsel %vm1870, %v1860, %v1494
        %v1894 = vsel %vm1870, %v1861, %v1496
        %v1895 = vsel %vm1870, %v1862, %v1498
        %v1896 = vsel %vm1870, %v1863, %v1500
        %v1897 = vsel %vm1870, %v1864, %v1502
        %v1898 = vsel %vm1870, %v1865, %v1504
        %v1899 = vsel %vm1870, %v1866, %v1506
        %v1900 = vsel %vm1870, %v1867, %v1508
        %v1901 = vsel %vm1870, %v1868, %v1510
        %v1902 = vsel %vm1870, %v1869, %v1512
        %v1903 = vsel %vm1771, %v1450, %v1162
        %v1904 = vsel %vm1771, %v1452, %v1164
        %v1905 = vsel %vm1771, %v1454, %v1166
        %v1906 = vsel %vm1771, %v1456, %v1168
        %v1907 = vsel %vm1771, %v1458, %v1170
        %v1908 = vsel %vm1771, %v1460, %v1172
        %v1909 = vsel %vm1771, %v1462, %v1174
        %v1910 = vsel %vm1771, %v1464, %v1176
        %v1911 = vsel %vm1771, %v1466, %v1178
        %v1912 = vsel %vm1771, %v1468, %v1180
        %v1913 = vsel %vm1771, %v1470, %v1182
        %v1914 = vsel %vm1771, %v1472, %v1184
        %v1915 = vsel %vm1771, %v1474, %v1186
        %v1916 = vsel %vm1771, %v1476, %v1188
        %v1917 = vsel %vm1771, %v1478, %v1190
        %v1918 = vsel %vm1771, %v1480, %v1192
        %v1919 = vsel %vm1771, %v1482, %v1194
        %v1920 = vsel %vm1771, %v1484, %v1196
        %v1921 = vsel %vm1771, %v1486, %v1198
        %v1922 = vsel %vm1771, %v1488, %v1200
        %v1923 = vsel %vm1771, %v1490, %v1202
        %v1924 = vsel %vm1771, %v1492, %v1204
        %v1925 = vsel %vm1771, %v1494, %v1206
        %v1926 = vsel %vm1771, %v1496, %v1208
        %v1927 = vsel %vm1771, %v1498, %v1210
        %v1928 = vsel %vm1771, %v1500, %v1212
        %v1929 = vsel %vm1771, %v1502, %v1214
        %v1930 = vsel %vm1771, %v1504, %v1216
        %v1931 = vsel %vm1771, %v1506, %v1218
        %v1932 = vsel %vm1771, %v1508, %v1220
        %v1933 = vsel %vm1771, %v1510, %v1222
        %v1934 = vsel %vm1771, %v1512, %v1224
        %v1935 = vsel %vm1804, %v1903, %v1578
        %v1936 = vsel %vm1804, %v1904, %v1580
        %v1937 = vsel %vm1804, %v1905, %v1582
        %v1938 = vsel %vm1804, %v1906, %v1584
        %v1939 = vsel %vm1804, %v1907, %v1586
        %v1940 = vsel %vm1804, %v1908, %v1588
        %v1941 = vsel %vm1804, %v1909, %v1590
        %v1942 = vsel %vm1804, %v1910, %v1592
        %v1943 = vsel %vm1804, %v1911, %v1594
        %v1944 = vsel %vm1804, %v1912, %v1596
        %v1945 = vsel %vm1804, %v1913, %v1598
        %v1946 = vsel %vm1804, %v1914, %v1600
        %v1947 = vsel %vm1804, %v1915, %v1602
        %v1948 = vsel %vm1804, %v1916, %v1604
        %v1949 = vsel %vm1804, %v1917, %v1606
        %v1950 = vsel %vm1804, %v1918, %v1608
        %v1951 = vsel %vm1804, %v1919, %v1610
        %v1952 = vsel %vm1804, %v1920, %v1612
        %v1953 = vsel %vm1804, %v1921, %v1614
        %v1954 = vsel %vm1804, %v1922, %v1616
        %v1955 = vsel %vm1804, %v1923, %v1618
        %v1956 = vsel %vm1804, %v1924, %v1620
        %v1957 = vsel %vm1804, %v1925, %v1622
        %v1958 = vsel %vm1804, %v1926, %v1624
        %v1959 = vsel %vm1804, %v1927, %v1626
        %v1960 = vsel %vm1804, %v1928, %v1628
        %v1961 = vsel %vm1804, %v1929, %v1630
        %v1962 = vsel %vm1804, %v1930, %v1632
        %v1963 = vsel %vm1804, %v1931, %v1634
        %v1964 = vsel %vm1804, %v1932, %v1636
        %v1965 = vsel %vm1804, %v1933, %v1638
        %v1966 = vsel %vm1804, %v1934, %v1640
        %1967 = vst [vmem:[%s189] sm:$0xff] %v1739
        %1968 = vst [vmem:[%s189 + $0x8] sm:$0xff] %v1871
        %vm1969 = vcmask 392192
        %1970 = vst.msk [vmem:[%s189 + $0x10] sm:$0xff] %vm1969, %v1935
        %1971 = vst [vmem:[%s189 + $0x18] sm:$0xff] %v1740
        %1972 = vst [vmem:[%s189 + $0x20] sm:$0xff] %v1872
        %1973 = vst.msk [vmem:[%s189 + $0x28] sm:$0xff] %vm1969, %v1936
        %1974 = vst [vmem:[%s189 + $0x30] sm:$0xff] %v1741
        %1975 = vst [vmem:[%s189 + $0x38] sm:$0xff] %v1873
        %1976 = vst.msk [vmem:[%s189 + $0x40] sm:$0xff] %vm1969, %v1937
        %1977 = vst [vmem:[%s189 + $0x48] sm:$0xff] %v1742
        %1978 = vst [vmem:[%s189 + $0x50] sm:$0xff] %v1874
        %1979 = vst.msk [vmem:[%s189 + $0x58] sm:$0xff] %vm1969, %v1938
        %1980 = vst [vmem:[%s189 + $0x60] sm:$0xff] %v1743
        %1981 = vst [vmem:[%s189 + $0x68] sm:$0xff] %v1875
        %1982 = vst.msk [vmem:[%s189 + $0x70] sm:$0xff] %vm1969, %v1939
        %1983 = vst [vmem:[%s189 + $0x78] sm:$0xff] %v1744
        %1984 = vst [vmem:[%s189 + $0x80] sm:$0xff] %v1876
        %1985 = vst.msk [vmem:[%s189 + $0x88] sm:$0xff] %vm1969, %v1940
        %1986 = vst [vmem:[%s189 + $0x90] sm:$0xff] %v1745
        %1987 = vst [vmem:[%s189 + $0x98] sm:$0xff] %v1877
        %1988 = vst.msk [vmem:[%s189 + $0xa0] sm:$0xff] %vm1969, %v1941
        %1989 = vst [vmem:[%s189 + $0xa8] sm:$0xff] %v1746
        %1990 = vst [vmem:[%s189 + $0xb0] sm:$0xff] %v1878
        %1991 = vst.msk [vmem:[%s189 + $0xb8] sm:$0xff] %vm1969, %v1942
        %1992 = vst [vmem:[%s189 + $0xc0] sm:$0xff] %v1747
        %1993 = vst [vmem:[%s189 + $0xc8] sm:$0xff] %v1879
        %1994 = vst.msk [vmem:[%s189 + $0xd0] sm:$0xff] %vm1969, %v1943
        %1995 = vst [vmem:[%s189 + $0xd8] sm:$0xff] %v1748
        %1996 = vst [vmem:[%s189 + $0xe0] sm:$0xff] %v1880
        %1997 = vst.msk [vmem:[%s189 + $0xe8] sm:$0xff] %vm1969, %v1944
        %1998 = vst [vmem:[%s189 + $0xf0] sm:$0xff] %v1749
        %1999 = vst [vmem:[%s189 + $0xf8] sm:$0xff] %v1881
        %2000 = vst.msk [vmem:[%s189 + $0x100] sm:$0xff] %vm1969, %v1945
        %2001 = vst [vmem:[%s189 + $0x108] sm:$0xff] %v1750
        %2002 = vst [vmem:[%s189 + $0x110] sm:$0xff] %v1882
        %2003 = vst.msk [vmem:[%s189 + $0x118] sm:$0xff] %vm1969, %v1946
        %2004 = vst [vmem:[%s189 + $0x120] sm:$0xff] %v1751
        %2005 = vst [vmem:[%s189 + $0x128] sm:$0xff] %v1883
        %2006 = vst.msk [vmem:[%s189 + $0x130] sm:$0xff] %vm1969, %v1947
        %2007 = vst [vmem:[%s189 + $0x138] sm:$0xff] %v1752
        %2008 = vst [vmem:[%s189 + $0x140] sm:$0xff] %v1884
        %2009 = vst.msk [vmem:[%s189 + $0x148] sm:$0xff] %vm1969, %v1948
        %2010 = vst [vmem:[%s189 + $0x150] sm:$0xff] %v1753
        %2011 = vst [vmem:[%s189 + $0x158] sm:$0xff] %v1885
        %2012 = vst.msk [vmem:[%s189 + $0x160] sm:$0xff] %vm1969, %v1949
        %2013 = vst [vmem:[%s189 + $0x168] sm:$0xff] %v1754
        %2014 = vst [vmem:[%s189 + $0x170] sm:$0xff] %v1886
        %2015 = vst.msk [vmem:[%s189 + $0x178] sm:$0xff] %vm1969, %v1950
        %2016 = vst [vmem:[%s189 + $0x180] sm:$0xff] %v1755
        %2017 = vst [vmem:[%s189 + $0x188] sm:$0xff] %v1887
        %2018 = vst.msk [vmem:[%s189 + $0x190] sm:$0xff] %vm1969, %v1951
        %2019 = vst [vmem:[%s189 + $0x198] sm:$0xff] %v1756
        %2020 = vst [vmem:[%s189 + $0x1a0] sm:$0xff] %v1888
        %2021 = vst.msk [vmem:[%s189 + $0x1a8] sm:$0xff] %vm1969, %v1952
        %2022 = vst [vmem:[%s189 + $0x1b0] sm:$0xff] %v1757
        %2023 = vst [vmem:[%s189 + $0x1b8] sm:$0xff] %v1889
        %2024 = vst.msk [vmem:[%s189 + $0x1c0] sm:$0xff] %vm1969, %v1953
        %2025 = vst [vmem:[%s189 + $0x1c8] sm:$0xff] %v1758
        %2026 = vst [vmem:[%s189 + $0x1d0] sm:$0xff] %v1890
        %2027 = vst.msk [vmem:[%s189 + $0x1d8] sm:$0xff] %vm1969, %v1954
        %2028 = vst [vmem:[%s189 + $0x1e0] sm:$0xff] %v1759
        %2029 = vst [vmem:[%s189 + $0x1e8] sm:$0xff] %v1891
        %2030 = vst.msk [vmem:[%s189 + $0x1f0] sm:$0xff] %vm1969, %v1955
        %2031 = vst [vmem:[%s189 + $0x1f8] sm:$0xff] %v1760
        %2032 = vst [vmem:[%s189 + $0x200] sm:$0xff] %v1892
        %2033 = vst.msk [vmem:[%s189 + $0x208] sm:$0xff] %vm1969, %v1956
        %2034 = vst [vmem:[%s189 + $0x210] sm:$0xff] %v1761
        %2035 = vst [vmem:[%s189 + $0x218] sm:$0xff] %v1893
        %2036 = vst.msk [vmem:[%s189 + $0x220] sm:$0xff] %vm1969, %v1957
        %2037 = vst [vmem:[%s189 + $0x228] sm:$0xff] %v1762
        %2038 = vst [vmem:[%s189 + $0x230] sm:$0xff] %v1894
        %2039 = vst.msk [vmem:[%s189 + $0x238] sm:$0xff] %vm1969, %v1958
        %2040 = vst [vmem:[%s189 + $0x240] sm:$0xff] %v1763
        %2041 = vst [vmem:[%s189 + $0x248] sm:$0xff] %v1895
        %2042 = vst.msk [vmem:[%s189 + $0x250] sm:$0xff] %vm1969, %v1959
        %2043 = vst [vmem:[%s189 + $0x258] sm:$0xff] %v1764
        %2044 = vst [vmem:[%s189 + $0x260] sm:$0xff] %v1896
        %2045 = vst.msk [vmem:[%s189 + $0x268] sm:$0xff] %vm1969, %v1960
        %2046 = vst [vmem:[%s189 + $0x270] sm:$0xff] %v1765
        %2047 = vst [vmem:[%s189 + $0x278] sm:$0xff] %v1897
        %2048 = vst.msk [vmem:[%s189 + $0x280] sm:$0xff] %vm1969, %v1961
        %2049 = vst [vmem:[%s189 + $0x288] sm:$0xff] %v1766
        %2050 = vst [vmem:[%s189 + $0x290] sm:$0xff] %v1898
        %2051 = vst.msk [vmem:[%s189 + $0x298] sm:$0xff] %vm1969, %v1962
        %2052 = vst [vmem:[%s189 + $0x2a0] sm:$0xff] %v1767
        %2053 = vst [vmem:[%s189 + $0x2a8] sm:$0xff] %v1899
        %2054 = vst.msk [vmem:[%s189 + $0x2b0] sm:$0xff] %vm1969, %v1963
        %2055 = vst [vmem:[%s189 + $0x2b8] sm:$0xff] %v1768
        %2056 = vst [vmem:[%s189 + $0x2c0] sm:$0xff] %v1900
        %2057 = vst.msk [vmem:[%s189 + $0x2c8] sm:$0xff] %vm1969, %v1964
        %2058 = vst [vmem:[%s189 + $0x2d0] sm:$0xff] %v1769
        %2059 = vst [vmem:[%s189 + $0x2d8] sm:$0xff] %v1901
        %2060 = vst.msk [vmem:[%s189 + $0x2e0] sm:$0xff] %vm1969, %v1965
        %2061 = vst [vmem:[%s189 + $0x2e8] sm:$0xff] %v1770
        %2062 = vst [vmem:[%s189 + $0x2f0] sm:$0xff] %v1902
        %2063 = vst.msk [vmem:[%s189 + $0x2f8] sm:$0xff] %vm1969, %v1966
        %s2064 = smul.u32 32, %s15
        %p2065 = scmp.lt.s32.totalorder %s2064, 127
        %s2066 = scalar_select %p2065, %s2064, 127
        %s2067 = smul.addr %s2066, 3
        %s2068 = smul.addr %s2067, 8
        %s2069 = scalar_lea.vmem %s3, %s2068
        // Predicated region
        $region37: #{tpu_custom_call.1} parent=31 // pred_check
          %p2070 = pneg %p101
        $region38: #{tpu_custom_call.1} parent=31 // pred_check_branch
          %2072 = sbr.rel (%p2070) target = $region40
        $region39: #{tpu_custom_call.1} parent=31 // pred_region
          %s2073 = smul.u32 32, %s15
        $region40: #{tpu_custom_call.1} parent=31 // pred_fallthru
          _
      $region32: #{tpu_custom_call.1} parent=5 // pred_fallthru
        _
      %p2074 = scmp.le.s32.totalorder 2, %s10
      // Predicated region
      $region41: #{tpu_custom_call.1} parent=5 // pred_check
        %p2075 = pneg %p2074
      $region42: #{tpu_custom_call.1} parent=5 // pred_check_branch
        %2077 = sbr.rel (%p2075) target = $region44
      $region43: #{tpu_custom_call.1} parent=5 // pred_region
        %s2078 = ssub.s32 %s10, 2
        // Predicated region
        $region45: #{tpu_custom_call.1} parent=43 // pred_check
          %p2079 = pneg %p107
        $region46: #{tpu_custom_call.1} parent=43 // pred_check_branch
          %2081 = sbr.rel (%p2079) target = $region48
        $region47: #{tpu_custom_call.1} parent=43 // pred_region
          %s2082 = smul.u32 32, %s16
          %p2083 = scmp.lt.s32.totalorder %s2082, 127
          %s2084 = scalar_select %p2083, %s2082, 127
          %s2085 = smul.addr %s2084, 3
          %s2086 = smul.addr %s2085, 8
          %s2087 = scalar_lea.vmem %s3, %s2086
        $region48: #{tpu_custom_call.1} parent=43 // pred_fallthru
          _
      $region44: #{tpu_custom_call.1} parent=5 // pred_fallthru
        _
    $region6: #{tpu_custom_call.1} parent=1 // loop_footer
      %s14 = sadd.s32 1, %s10
    $region7: #{tpu_custom_call.1} parent=1 // loop_footer_branch
      %9 = sbr.rel target = $region3
    $region8: #{tpu_custom_call.1} parent=1 // loop_exit
      _
    %2088 = vsyncpa [#allocation3], 1
    %s2089 = scalar_lea.sflag [#allocation3], 1
    %2090 = vsyncpa %s2089, 1

</llo_original>
